<compile_context>
chip_gen: v6e
topology: v6e:2x2x1
jax: 0.10.0
libtpu: 0.0.40
codegen_flags: <defaults>
</compile_context>

<pallas_src>
import math

import jax
import jax.numpy as jnp
from jax.experimental import pallas as pl
from jax.experimental.pallas import tpu as pltpu

DIMS = (1024, 512, 256, 128, 2)   # Classifier default `dims`
BATCH = 8

N_OUT_PAD = 128                   # final layer padded to 128 lanes (lane-dense store)

# Offsets inside the packed (1, 1024) bias slab: [b1 | b2 | b3 | b4_padded]
_B1 = DIMS[1]                     # 512
_B2 = _B1 + DIMS[2]               # 768
_B3 = _B2 + DIMS[3]               # 896
_B4 = _B3 + N_OUT_PAD             # 1024


def _cdiv(a, b):
    return (a + b - 1) // b


def _round_up(n, m):
    return _cdiv(n, m) * m


def _choose_batch_tile(B):
    """Pick the batch tile (rows per grid step).

    * B <= 256: single tile (latency path), rounded to 16 sublanes (bf16 packing).
    * B  > 256: cap tiles at 512 rows and force >= 2 tiles so the "parallel" batch
      axis can shard across v7x's two TensorCores (harmless on v5e/v6e).
    """
    if B <= 256:
        return _round_up(B, 16)
    n_tiles = max(2, _cdiv(B, 512))
    return min(512, _round_up(_cdiv(B, n_tiles), 16))


def _mlp_kernel(x_ref, w1_ref, w2_ref, w34_ref, b_ref, o_ref):
    # Static slices of the packed bias slab (all boundaries are multiples of 128).
    b1 = b_ref[:, 0:_B1]
    b2 = b_ref[:, _B1:_B2]
    b3 = b_ref[:, _B2:_B3]
    b4 = b_ref[:, _B3:_B4]

    # Layer 1 + ReLU  (bf16 MXU operands, f32 accumulation / elementwise)
    h = jnp.dot(x_ref[...], w1_ref[...], preferred_element_type=jnp.float32)
    h = jnp.maximum(h + b1, 0.0)
    # Layer 2 + ReLU
    h = jnp.dot(h.astype(jnp.bfloat16), w2_ref[...],
                preferred_element_type=jnp.float32)
    h = jnp.maximum(h + b2, 0.0)
    # Layer 3 + ReLU   (first 256 rows of the packed w3/w4 slab)
    h = jnp.dot(h.astype(jnp.bfloat16), w34_ref[0:DIMS[2], :],
                preferred_element_type=jnp.float32)
    h = jnp.maximum(h + b3, 0.0)
    # Layer 4 (no activation), padded to 128 output lanes; bf16 lane-dense store.
    h = jnp.dot(h.astype(jnp.bfloat16), w34_ref[DIMS[2]:DIMS[2] + DIMS[3], :],
                preferred_element_type=jnp.float32)
    o_ref[...] = (h + b4).astype(o_ref.dtype)


def pack_params(params):
    """Pack f32 (W, b) pairs (W = (in, out), b = (1, out)) into the kernel layout.

    Done once, outside the hot path:
      w1:(1024,512) bf16, w2:(512,256) bf16, w34:(384,128) bf16 (= [w3; w4 zero-padded]),
      biases:(1,1024) f32 (= [b1 | b2 | b3 | b4 zero-padded to 128]).
    """
    (w1, b1), (w2, b2), (w3, b3), (w4, b4) = params
    w1 = w1.astype(jnp.bfloat16)
    w2 = w2.astype(jnp.bfloat16)
    w4p = jnp.zeros((DIMS[3], N_OUT_PAD), jnp.float32).at[:, :DIMS[4]].set(w4)
    w34 = jnp.concatenate([w3, w4p], axis=0).astype(jnp.bfloat16)      # (384, 128)
    b4p = jnp.zeros((1, N_OUT_PAD), jnp.float32).at[:, :DIMS[4]].set(b4)
    biases = jnp.concatenate([b1, b2, b3, b4p], axis=1)                # (1, 1024) f32
    return w1, w2, w34, biases


def classifier_forward(x, w1, w2, w34, biases):
    """x: (B, 1024) float32 or bfloat16.  Packed params from pack_params().

    Returns (B, 2) float32 logits (matches Classifier.forward).
    """
    B = x.shape[0]
    if x.dtype != jnp.bfloat16:
        # Ideally the producer already emits bf16; cast here at the model boundary.
        x = x.astype(jnp.bfloat16)

    TB = _choose_batch_tile(B)
    B_pad = _round_up(B, TB)
    if B_pad != B:
        x = jnp.pad(x, ((0, B_pad - B), (0, 0)))
    grid = (B_pad // TB,)

    flops = 2 * B_pad * (DIMS[0] * DIMS[1] + DIMS[1] * DIMS[2]
                         + DIMS[2] * DIMS[3] + DIMS[3] * N_OUT_PAD)
    bytes_accessed = (x.size * 2 + w1.size * 2 + w2.size * 2 + w34.size * 2
                      + biases.size * 4 + B_pad * N_OUT_PAD * 2)

    out = pl.pallas_call(
        _mlp_kernel,
        out_shape=jax.ShapeDtypeStruct((B_pad, N_OUT_PAD), jnp.bfloat16),
        grid=grid,
        in_specs=[
            pl.BlockSpec((TB, DIMS[0]), lambda i: (i, 0)),   # x: tiled over batch
            pl.BlockSpec(w1.shape, lambda i: (0, 0)),        # weights: VMEM-resident
            pl.BlockSpec(w2.shape, lambda i: (0, 0)),
            pl.BlockSpec(w34.shape, lambda i: (0, 0)),
            pl.BlockSpec(biases.shape, lambda i: (0, 0)),
        ],
        out_specs=pl.BlockSpec((TB, N_OUT_PAD), lambda i: (i, 0)),
        compiler_params=pltpu.CompilerParams(
            dimension_semantics=("parallel",)),
        cost_estimate=pl.CostEstimate(
            flops=flops, transcendentals=0, bytes_accessed=bytes_accessed),
    )(x, w1, w2, w34, biases)

    return out[:B, :DIMS[-1]].astype(jnp.float32)


def init_params(key):
    """Deterministic PyTorch-style Linear init: U(-1/sqrt(fan_in), 1/sqrt(fan_in))."""
    params = []
    for i in range(len(DIMS) - 1):
        fan_in, fan_out = DIMS[i], DIMS[i + 1]
        key, kw, kb = jax.random.split(key, 3)
        bound = 1.0 / math.sqrt(fan_in)
        w = jax.random.uniform(kw, (fan_in, fan_out), jnp.float32, -bound, bound)
        b = jax.random.uniform(kb, (1, fan_out), jnp.float32, -bound, bound)
        params.append((w, b))
    return params


def _bf16_round(v):
    return v.astype(jnp.bfloat16).astype(jnp.float32)


def reference_forward(x, params):
    """Pure-JAX reference mirroring the kernel's numerics:

    weights, the input and every inter-layer activation are rounded through bf16
    (MXU operands), matmul accumulation and bias/ReLU are f32, and the final output
    is rounded through bf16 (the kernel's store dtype).
    """
    h = _bf16_round(x)
    n = len(params)
    for i, (w, b) in enumerate(params):
        w = _bf16_round(w)
        h = h @ w + b
        if i < n - 1:
            h = _bf16_round(jnp.maximum(h, 0.0))
    return _bf16_round(h)


if __name__ == "__main__":
    key = jax.random.PRNGKey(0)
    key, kx = jax.random.split(key)
    x = jax.random.normal(kx, (BATCH, DIMS[0]), dtype=jnp.float32)
    params = init_params(key)
    w1, w2, w34, biases = pack_params(params)

    # Cast once at the producer side (halves input DMA; v6e/v7x are otherwise
    # input-DMA-bound at large batch).
    out = classifier_forward(x.astype(jnp.bfloat16), w1, w2, w34, biases)
    out = jax.block_until_ready(out)

    ref = reference_forward(x, params)
    assert out.shape == (BATCH, DIMS[-1])
    # Remaining difference vs the mirrored reference is MXU accumulation order only.
    assert jnp.allclose(out, ref, atol=3e-2, rtol=3e-2), "mismatch vs reference"

    print("KERNEL_OK")
</pallas_src>

<mosaic_0001>
module attributes {stable_mosaic.version = 11 : i64} {
  func.func @_mlp_kernel(%arg0: i32, %arg1: memref<16x1024xbf16, #tpu.memory_space<vmem>>, %arg2: memref<1024x512xbf16, #tpu.memory_space<vmem>>, %arg3: memref<512x256xbf16, #tpu.memory_space<vmem>>, %arg4: memref<384x128xbf16, #tpu.memory_space<vmem>>, %arg5: memref<1x1024xf32, #tpu.memory_space<vmem>>, %arg6: memref<16x128xbf16, #tpu.memory_space<vmem>>) attributes {dimension_semantics = [#tpu.dimension_semantics<parallel>], iteration_bounds = array<i64: 1>, scalar_prefetch = 0 : i64, scratch_operands = 0 : i64, tpu.core_type = #tpu.core_type<tc>, window_params = [{transform_indices = @transform_0, window_bounds = array<i64: 16, 1024>}, {pipeline_mode = #tpu.pipeline_mode<synchronous>, transform_indices = @transform_1, window_bounds = array<i64: 1024, 512>}, {pipeline_mode = #tpu.pipeline_mode<synchronous>, transform_indices = @transform_2, window_bounds = array<i64: 512, 256>}, {pipeline_mode = #tpu.pipeline_mode<synchronous>, transform_indices = @transform_3, window_bounds = array<i64: 384, 128>}, {pipeline_mode = #tpu.pipeline_mode<synchronous>, transform_indices = @transform_4, window_bounds = array<i64: 1, 1024>}, {transform_indices = @transform_5, window_bounds = array<i64: 16, 128>}]} {
    %c0 = arith.constant 0 : index
    %c0_0 = arith.constant 0 : index
    %0 = vector.load %arg5[%c0, %c0_0] : memref<1x1024xf32, #tpu.memory_space<vmem>>, vector<1x512xf32>
    %c0_1 = arith.constant 0 : index
    %c512 = arith.constant 512 : index
    %1 = vector.load %arg5[%c0_1, %c512] : memref<1x1024xf32, #tpu.memory_space<vmem>>, vector<1x256xf32>
    %c0_2 = arith.constant 0 : index
    %c768 = arith.constant 768 : index
    %2 = vector.load %arg5[%c0_2, %c768] : memref<1x1024xf32, #tpu.memory_space<vmem>>, vector<1x128xf32>
    %c0_3 = arith.constant 0 : index
    %c896 = arith.constant 896 : index
    %3 = vector.load %arg5[%c0_3, %c896] : memref<1x1024xf32, #tpu.memory_space<vmem>>, vector<1x128xf32>
    %c0_4 = arith.constant 0 : index
    %c0_5 = arith.constant 0 : index
    %4 = vector.load %arg1[%c0_4, %c0_5] : memref<16x1024xbf16, #tpu.memory_space<vmem>>, vector<16x1024xbf16>
    %c0_6 = arith.constant 0 : index
    %c0_7 = arith.constant 0 : index
    %5 = vector.load %arg2[%c0_6, %c0_7] : memref<1024x512xbf16, #tpu.memory_space<vmem>>, vector<1024x512xbf16>
    %cst = arith.constant dense<0.000000e+00> : vector<16x512xf32>
    %6 = tpu.matmul %4, %5, %cst {dimension_numbers = #tpu.dot_dimension_numbers<[1], [0], [0], [1], [0, 0, 1, 1], [], []>} : vector<16x1024xbf16>, vector<1024x512xbf16>, vector<16x512xf32> -> vector<16x512xf32>
    %7 = vector.broadcast %0 : vector<1x512xf32> to vector<16x512xf32>
    %8 = arith.addf %6, %7 : vector<16x512xf32>
    %cst_8 = arith.constant 0.000000e+00 : f32
    %9 = vector.broadcast %cst_8 : f32 to vector<16x512xf32>
    %10 = arith.maximumf %8, %9 : vector<16x512xf32>
    %11 = arith.truncf %10 : vector<16x512xf32> to vector<16x512xbf16>
    %c0_9 = arith.constant 0 : index
    %c0_10 = arith.constant 0 : index
    %12 = vector.load %arg3[%c0_9, %c0_10] : memref<512x256xbf16, #tpu.memory_space<vmem>>, vector<512x256xbf16>
    %cst_11 = arith.constant dense<0.000000e+00> : vector<16x256xf32>
    %13 = tpu.matmul %11, %12, %cst_11 {dimension_numbers = #tpu.dot_dimension_numbers<[1], [0], [0], [1], [0, 0, 1, 1], [], []>} : vector<16x512xbf16>, vector<512x256xbf16>, vector<16x256xf32> -> vector<16x256xf32>
    %14 = vector.broadcast %1 : vector<1x256xf32> to vector<16x256xf32>
    %15 = arith.addf %13, %14 : vector<16x256xf32>
    %cst_12 = arith.constant 0.000000e+00 : f32
    %16 = vector.broadcast %cst_12 : f32 to vector<16x256xf32>
    %17 = arith.maximumf %15, %16 : vector<16x256xf32>
    %18 = arith.truncf %17 : vector<16x256xf32> to vector<16x256xbf16>
    %c0_13 = arith.constant 0 : index
    %c0_14 = arith.constant 0 : index
    %19 = vector.load %arg4[%c0_13, %c0_14] : memref<384x128xbf16, #tpu.memory_space<vmem>>, vector<256x128xbf16>
    %cst_15 = arith.constant dense<0.000000e+00> : vector<16x128xf32>
    %20 = tpu.matmul %18, %19, %cst_15 {dimension_numbers = #tpu.dot_dimension_numbers<[1], [0], [0], [1], [0, 0, 1, 1], [], []>} : vector<16x256xbf16>, vector<256x128xbf16>, vector<16x128xf32> -> vector<16x128xf32>
    %21 = vector.broadcast %2 : vector<1x128xf32> to vector<16x128xf32>
    %22 = arith.addf %20, %21 : vector<16x128xf32>
    %cst_16 = arith.constant 0.000000e+00 : f32
    %23 = vector.broadcast %cst_16 : f32 to vector<16x128xf32>
    %24 = arith.maximumf %22, %23 : vector<16x128xf32>
    %25 = arith.truncf %24 : vector<16x128xf32> to vector<16x128xbf16>
    %c256 = arith.constant 256 : index
    %c0_17 = arith.constant 0 : index
    %26 = vector.load %arg4[%c256, %c0_17] : memref<384x128xbf16, #tpu.memory_space<vmem>>, vector<128x128xbf16>
    %cst_18 = arith.constant dense<0.000000e+00> : vector<16x128xf32>
    %27 = tpu.matmul %25, %26, %cst_18 {dimension_numbers = #tpu.dot_dimension_numbers<[1], [0], [0], [1], [0, 0, 1, 1], [], []>} : vector<16x128xbf16>, vector<128x128xbf16>, vector<16x128xf32> -> vector<16x128xf32>
    %28 = vector.broadcast %3 : vector<1x128xf32> to vector<16x128xf32>
    %29 = arith.addf %27, %28 : vector<16x128xf32>
    %30 = arith.truncf %29 : vector<16x128xf32> to vector<16x128xbf16>
    %c0_19 = arith.constant 0 : index
    %c0_20 = arith.constant 0 : index
    %31 = vector.load %arg6[%c0_19, %c0_20] : memref<16x128xbf16, #tpu.memory_space<vmem>>, vector<16x128xbf16>
    tpu.vector_store %arg6[%c0_19, %c0_20], %30 {strides = array<i32>} : memref<16x128xbf16, #tpu.memory_space<vmem>>, vector<16x128xbf16>,
    return
  }
  func.func @transform_0(%arg0: i32) -> (i32, i32) {
    %c0_i32 = arith.constant 0 : i32
    %c0_i32_0 = arith.constant 0 : i32
    return %arg0, %c0_i32 : i32, i32
  }
  func.func @transform_1(%arg0: i32) -> (i32, i32) {
    %c0_i32 = arith.constant 0 : i32
    %c0_i32_0 = arith.constant 0 : i32
    %c0_i32_1 = arith.constant 0 : i32
    return %c0_i32, %c0_i32_0 : i32, i32
  }
  func.func @transform_2(%arg0: i32) -> (i32, i32) {
    %c0_i32 = arith.constant 0 : i32
    %c0_i32_0 = arith.constant 0 : i32
    %c0_i32_1 = arith.constant 0 : i32
    return %c0_i32, %c0_i32_0 : i32, i32
  }
  func.func @transform_3(%arg0: i32) -> (i32, i32) {
    %c0_i32 = arith.constant 0 : i32
    %c0_i32_0 = arith.constant 0 : i32
    %c0_i32_1 = arith.constant 0 : i32
    return %c0_i32, %c0_i32_0 : i32, i32
  }
  func.func @transform_4(%arg0: i32) -> (i32, i32) {
    %c0_i32 = arith.constant 0 : i32
    %c0_i32_0 = arith.constant 0 : i32
    %c0_i32_1 = arith.constant 0 : i32
    return %c0_i32, %c0_i32_0 : i32, i32
  }
  func.func @transform_5(%arg0: i32) -> (i32, i32) {
    %c0_i32 = arith.constant 0 : i32
    %c0_i32_0 = arith.constant 0 : i32
    return %arg0, %c0_i32 : i32, i32
  }
}

</mosaic_0001>

<llo_original>
// kernel: tpu_custom_call.1
$region0: #{tpu_custom_call.1}
  #allocation0 [shape = 'u32[]', space=smem, size = 0x4, offset = 0x4, fixed_abs, tag = 'smem constant byte address 0x4 - core index']
  #allocation1 [shape = 'u32[144,128]{1,0:T(1,128)}', space=vmem, size = 0x12000, scoped, tag = 'internal scratch']
  %s0 = inlined_call_operand.hbm [shape: bf16[16,1024], index: 0, kind: input, shape index: {}]
  %s1 = inlined_call_operand.hbm [shape: bf16[1024,512], index: 1, kind: input, shape index: {}]
  %s2 = inlined_call_operand.hbm [shape: bf16[512,256], index: 2, kind: input, shape index: {}]
  %s3 = inlined_call_operand.hbm [shape: bf16[384,128], index: 3, kind: input, shape index: {}]
  %s4 = inlined_call_operand.hbm [shape: f32[1,1024], index: 4, kind: input, shape index: {}]
  %s5 = inlined_call_operand.hbm [shape: bf16[16,128], index: 5, kind: output, shape index: {}]
  %s6 = sld [smem:[#allocation0]]
  $region50: #{tpu_custom_call.1} parent=0
    _
  %s8 = ssub.s32 1, %s6
  %s9 = scalar_select 0, %s8, %s6
  $region1: #{tpu_custom_call.1} parent=0
    #allocation2 [shape = 'u8[32768]{0}', space=vmem, size = 0x8000, scoped, tag = 'input window, operand 0, single buffered']
    #allocation3 [shape = 's32[1]{0}', space=sflag, size = 0x4, scoped, tag = 'scoped memory for tpu_custom_call.1']
    #allocation4 [shape = 's32[1]{0}', space=sflag, size = 0x4, scoped, tag = 'scoped memory for tpu_custom_call.1']
    #allocation5 [shape = 'u8[1048576]{0}', space=vmem, size = 0x100000, scoped, tag = 'input window, operand 1, single buffered']
    #allocation6 [shape = 's32[1]{0}', space=sflag, size = 0x4, scoped, tag = 'scoped memory for tpu_custom_call.1']
    #allocation7 [shape = 'u8[262144]{0}', space=vmem, size = 0x40000, scoped, tag = 'input window, operand 2, single buffered']
    #allocation8 [shape = 'u8[98304]{0}', space=vmem, size = 0x18000, scoped, tag = 'input window, operand 3, single buffered']
    #allocation9 [shape = 's32[1]{0}', space=sflag, size = 0x4, scoped, tag = 'scoped memory for tpu_custom_call.1']
    #allocation10 [shape = 'u8[4096]{0}', space=vmem, size = 0x1000, scoped, tag = 'input window, operand 4, single buffered']
    #allocation11 [shape = 'u8[4096]{0}', space=vmem, size = 0x1000, scoped, tag = 'output window, operand 0, single buffered']
    %10 = vsyncpa [#allocation3], 0
    %11 = vsyncpa [#allocation6], 0
    %12 = vsyncpa [#allocation9], 0
    %13 = vsyncpa [#allocation4], 0
    // Predicated region
    $region2: #{tpu_custom_call.1} parent=1 // pred_check
      _
    $region3: #{tpu_custom_call.1} parent=1 // pred_check_branch
      %15 = sbr.rel (0) target = $region5
    $region4: #{tpu_custom_call.1} parent=1 // pred_region
      %s17 = ssub.s32 1024, 1024
      %18 = vsyncadd [#allocation3], %s17
      %s19 = sshll.u32 [#allocation2], 4
      %s20 = int_to_ptr.vmem [resolvable:$true] %s19
      %25 = dma.hbm_to_vmem [thread:$0]  %s0, 1024, %s20, [#allocation3], 512, 512, 32
    $region5: #{tpu_custom_call.1} parent=1 // pred_fallthru
      _
    // Predicated region
    $region6: #{tpu_custom_call.1} parent=1 // pred_check
      _
    $region7: #{tpu_custom_call.1} parent=1 // pred_check_branch
      %27 = sbr.rel (0) target = $region9
    $region8: #{tpu_custom_call.1} parent=1 // pred_region
      %s29 = ssub.s32 32768, 32768
      %30 = vsyncadd [#allocation6], %s29
      %s31 = sshll.u32 [#allocation5], 4
      %s32 = int_to_ptr.vmem [resolvable:$true] %s31
      %37 = dma.hbm_to_vmem [thread:$0]  %s1, 32768, %s32, [#allocation6], 256, 256, 16
    $region9: #{tpu_custom_call.1} parent=1 // pred_fallthru
      _
    // Predicated region
    $region10: #{tpu_custom_call.1} parent=1 // pred_check
      _
    $region11: #{tpu_custom_call.1} parent=1 // pred_check_branch
      %39 = sbr.rel (0) target = $region13
    $region12: #{tpu_custom_call.1} parent=1 // pred_region
      %s41 = ssub.s32 8192, 8192
      %42 = vsyncadd [#allocation6], %s41
      %s43 = sshll.u32 [#allocation7], 4
      %s44 = int_to_ptr.vmem [resolvable:$true] %s43
      %49 = dma.hbm_to_vmem [thread:$0]  %s2, 8192, %s44, [#allocation6], 128, 128, 8
    $region13: #{tpu_custom_call.1} parent=1 // pred_fallthru
      _
    // Predicated region
    $region14: #{tpu_custom_call.1} parent=1 // pred_check
      _
    $region15: #{tpu_custom_call.1} parent=1 // pred_check_branch
      %51 = sbr.rel (0) target = $region17
    $region16: #{tpu_custom_call.1} parent=1 // pred_region
      %s53 = ssub.s32 3072, 3072
      %54 = vsyncadd [#allocation9], %s53
      %s55 = sshll.u32 [#allocation8], 4
      %s56 = int_to_ptr.vmem [resolvable:$true] %s55
      %61 = dma.hbm_to_vmem [thread:$0]  %s3, 3072, %s56, [#allocation9], 64, 64, 4
    $region17: #{tpu_custom_call.1} parent=1 // pred_fallthru
      _
    // Predicated region
    $region18: #{tpu_custom_call.1} parent=1 // pred_check
      _
    $region19: #{tpu_custom_call.1} parent=1 // pred_check_branch
      %63 = sbr.rel (0) target = $region21
    $region20: #{tpu_custom_call.1} parent=1 // pred_region
      %s65 = ssub.s32 128, 128
      %66 = vsyncadd [#allocation9], %s65
      %s68 = sshll.u32 [#allocation10], 4
      %s69 = int_to_ptr.vmem [resolvable:$true] %s68
      %71 = dma.hbm_to_vmem [thread:$0]  %s4, 128, %s69, [#allocation9]
    $region21: #{tpu_custom_call.1} parent=1 // pred_fallthru
      _
    // Predicated region
    $region22: #{tpu_custom_call.1} parent=1 // pred_check
      _
    $region23: #{tpu_custom_call.1} parent=1 // pred_check_branch
      %73 = sbr.rel (0) target = $region25
    $region24: #{tpu_custom_call.1} parent=1 // pred_region
      %74 = dma.done [#allocation3], 1024
    $region25: #{tpu_custom_call.1} parent=1 // pred_fallthru
      _
    // Predicated region
    $region26: #{tpu_custom_call.1} parent=1 // pred_check
      _
    $region27: #{tpu_custom_call.1} parent=1 // pred_check_branch
      %76 = sbr.rel (0) target = $region29
    $region28: #{tpu_custom_call.1} parent=1 // pred_region
      %77 = dma.done [#allocation6], 32768
    $region29: #{tpu_custom_call.1} parent=1 // pred_fallthru
      _
    // Predicated region
    $region30: #{tpu_custom_call.1} parent=1 // pred_check
      _
    $region31: #{tpu_custom_call.1} parent=1 // pred_check_branch
      %79 = sbr.rel (0) target = $region33
    $region32: #{tpu_custom_call.1} parent=1 // pred_region
      %80 = dma.done [#allocation6], 8192
    $region33: #{tpu_custom_call.1} parent=1 // pred_fallthru
      _
    // Predicated region
    $region34: #{tpu_custom_call.1} parent=1 // pred_check
      _
    $region35: #{tpu_custom_call.1} parent=1 // pred_check_branch
      %82 = sbr.rel (0) target = $region37
    $region36: #{tpu_custom_call.1} parent=1 // pred_region
      %83 = dma.done [#allocation9], 3072
    $region37: #{tpu_custom_call.1} parent=1 // pred_fallthru
      _
    // Predicated region
    $region38: #{tpu_custom_call.1} parent=1 // pred_check
      _
    $region39: #{tpu_custom_call.1} parent=1 // pred_check_branch
      %85 = sbr.rel (0) target = $region41
    $region40: #{tpu_custom_call.1} parent=1 // pred_region
      %86 = dma.done [#allocation9], 128
    $region41: #{tpu_custom_call.1} parent=1 // pred_fallthru
      _
    %v88 = vld [vmem:[#allocation10] sm:$0xf]
    %v89 = vld [vmem:[#allocation10 + $0x4] sm:$0x3]
    %v90 = vld [vmem:[#allocation10 + $0x6] sm:$0x1]
    %v91 = vld [vmem:[#allocation10 + $0x7] sm:$0x1]
    %v92 = vld [vmem:[#allocation2] sm:$0xff]
    %v93 = vld [vmem:[#allocation2 + $0x8] sm:$0xff]
    %v94 = vld [vmem:[#allocation2 + $0x10] sm:$0xff]
    %v95 = vld [vmem:[#allocation2 + $0x18] sm:$0xff]
    %v96 = vld [vmem:[#allocation2 + $0x20] sm:$0xff]
    %v97 = vld [vmem:[#allocation2 + $0x28] sm:$0xff]
    %v98 = vld [vmem:[#allocation2 + $0x30] sm:$0xff]
    %v99 = vld [vmem:[#allocation2 + $0x38] sm:$0xff]
    %v100 = vld [vmem:[#allocation5] sm:$0xff]
    %v101 = vld [vmem:[#allocation5 + $0x8] sm:$0xff]
    %v102 = vld [vmem:[#allocation5 + $0x10] sm:$0xff]
    %v103 = vld [vmem:[#allocation5 + $0x18] sm:$0xff]
    %v104 = vld [vmem:[#allocation5 + $0x20] sm:$0xff]
    %v105 = vld [vmem:[#allocation5 + $0x28] sm:$0xff]
    %v106 = vld [vmem:[#allocation5 + $0x30] sm:$0xff]
    %v107 = vld [vmem:[#allocation5 + $0x38] sm:$0xff]
    %v108 = vld [vmem:[#allocation5 + $0x40] sm:$0xff]
    %v109 = vld [vmem:[#allocation5 + $0x48] sm:$0xff]
    %v110 = vld [vmem:[#allocation5 + $0x50] sm:$0xff]
    %v111 = vld [vmem:[#allocation5 + $0x58] sm:$0xff]
    %v112 = vld [vmem:[#allocation5 + $0x60] sm:$0xff]
    %v113 = vld [vmem:[#allocation5 + $0x68] sm:$0xff]
    %v114 = vld [vmem:[#allocation5 + $0x70] sm:$0xff]
    %v115 = vld [vmem:[#allocation5 + $0x78] sm:$0xff]
    %v116 = vld [vmem:[#allocation5 + $0x80] sm:$0xff]
    %v117 = vld [vmem:[#allocation5 + $0x88] sm:$0xff]
    %v118 = vld [vmem:[#allocation5 + $0x90] sm:$0xff]
    %v119 = vld [vmem:[#allocation5 + $0x98] sm:$0xff]
    %v120 = vld [vmem:[#allocation5 + $0xa0] sm:$0xff]
    %v121 = vld [vmem:[#allocation5 + $0xa8] sm:$0xff]
    %v122 = vld [vmem:[#allocation5 + $0xb0] sm:$0xff]
    %v123 = vld [vmem:[#allocation5 + $0xb8] sm:$0xff]
    %v124 = vld [vmem:[#allocation5 + $0xc0] sm:$0xff]
    %v125 = vld [vmem:[#allocation5 + $0xc8] sm:$0xff]
    %v126 = vld [vmem:[#allocation5 + $0xd0] sm:$0xff]
    %v127 = vld [vmem:[#allocation5 + $0xd8] sm:$0xff]
    %v128 = vld [vmem:[#allocation5 + $0xe0] sm:$0xff]
    %v129 = vld [vmem:[#allocation5 + $0xe8] sm:$0xff]
    %v130 = vld [vmem:[#allocation5 + $0xf0] sm:$0xff]
    %v131 = vld [vmem:[#allocation5 + $0xf8] sm:$0xff]
    %v132 = vld [vmem:[#allocation5 + $0x100] sm:$0xff]
    %v133 = vld [vmem:[#allocation5 + $0x108] sm:$0xff]
    %v134 = vld [vmem:[#allocation5 + $0x110] sm:$0xff]
    %v135 = vld [vmem:[#allocation5 + $0x118] sm:$0xff]
    %v136 = vld [vmem:[#allocation5 + $0x120] sm:$0xff]
    %v137 = vld [vmem:[#allocation5 + $0x128] sm:$0xff]
    %v138 = vld [vmem:[#allocation5 + $0x130] sm:$0xff]
    %v139 = vld [vmem:[#allocation5 + $0x138] sm:$0xff]
    %v140 = vld [vmem:[#allocation5 + $0x140] sm:$0xff]
    %v141 = vld [vmem:[#allocation5 + $0x148] sm:$0xff]
    %v142 = vld [vmem:[#allocation5 + $0x150] sm:$0xff]
    %v143 = vld [vmem:[#allocation5 + $0x158] sm:$0xff]
    %v144 = vld [vmem:[#allocation5 + $0x160] sm:$0xff]
    %v145 = vld [vmem:[#allocation5 + $0x168] sm:$0xff]
    %v146 = vld [vmem:[#allocation5 + $0x170] sm:$0xff]
    %v147 = vld [vmem:[#allocation5 + $0x178] sm:$0xff]
    %v148 = vld [vmem:[#allocation5 + $0x180] sm:$0xff]
    %v149 = vld [vmem:[#allocation5 + $0x188] sm:$0xff]
    %v150 = vld [vmem:[#allocation5 + $0x190] sm:$0xff]
    %v151 = vld [vmem:[#allocation5 + $0x198] sm:$0xff]
    %v152 = vld [vmem:[#allocation5 + $0x1a0] sm:$0xff]
    %v153 = vld [vmem:[#allocation5 + $0x1a8] sm:$0xff]
    %v154 = vld [vmem:[#allocation5 + $0x1b0] sm:$0xff]
    %v155 = vld [vmem:[#allocation5 + $0x1b8] sm:$0xff]
    %v156 = vld [vmem:[#allocation5 + $0x1c0] sm:$0xff]
    %v157 = vld [vmem:[#allocation5 + $0x1c8] sm:$0xff]
    %v158 = vld [vmem:[#allocation5 + $0x1d0] sm:$0xff]
    %v159 = vld [vmem:[#allocation5 + $0x1d8] sm:$0xff]
    %v160 = vld [vmem:[#allocation5 + $0x1e0] sm:$0xff]
    %v161 = vld [vmem:[#allocation5 + $0x1e8] sm:$0xff]
    %v162 = vld [vmem:[#allocation5 + $0x1f0] sm:$0xff]
    %v163 = vld [vmem:[#allocation5 + $0x1f8] sm:$0xff]
    %v164 = vld [vmem:[#allocation5 + $0x200] sm:$0xff]
    %v165 = vld [vmem:[#allocation5 + $0x208] sm:$0xff]
    %v166 = vld [vmem:[#allocation5 + $0x210] sm:$0xff]
    %v167 = vld [vmem:[#allocation5 + $0x218] sm:$0xff]
    %v168 = vld [vmem:[#allocation5 + $0x220] sm:$0xff]
    %v169 = vld [vmem:[#allocation5 + $0x228] sm:$0xff]
    %v170 = vld [vmem:[#allocation5 + $0x230] sm:$0xff]
    %v171 = vld [vmem:[#allocation5 + $0x238] sm:$0xff]
    %v172 = vld [vmem:[#allocation5 + $0x240] sm:$0xff]
    %v173 = vld [vmem:[#allocation5 + $0x248] sm:$0xff]
    %v174 = vld [vmem:[#allocation5 + $0x250] sm:$0xff]
    %v175 = vld [vmem:[#allocation5 + $0x258] sm:$0xff]
    %v176 = vld [vmem:[#allocation5 + $0x260] sm:$0xff]
    %v177 = vld [vmem:[#allocation5 + $0x268] sm:$0xff]
    %v178 = vld [vmem:[#allocation5 + $0x270] sm:$0xff]
    %v179 = vld [vmem:[#allocation5 + $0x278] sm:$0xff]
    %v180 = vld [vmem:[#allocation5 + $0x280] sm:$0xff]
    %v181 = vld [vmem:[#allocation5 + $0x288] sm:$0xff]
    %v182 = vld [vmem:[#allocation5 + $0x290] sm:$0xff]
    %v183 = vld [vmem:[#allocation5 + $0x298] sm:$0xff]
    %v184 = vld [vmem:[#allocation5 + $0x2a0] sm:$0xff]
    %v185 = vld [vmem:[#allocation5 + $0x2a8] sm:$0xff]
    %v186 = vld [vmem:[#allocation5 + $0x2b0] sm:$0xff]
    %v187 = vld [vmem:[#allocation5 + $0x2b8] sm:$0xff]
    %v188 = vld [vmem:[#allocation5 + $0x2c0] sm:$0xff]
    %v189 = vld [vmem:[#allocation5 + $0x2c8] sm:$0xff]
    %v190 = vld [vmem:[#allocation5 + $0x2d0] sm:$0xff]
    %v191 = vld [vmem:[#allocation5 + $0x2d8] sm:$0xff]
    %v192 = vld [vmem:[#allocation5 + $0x2e0] sm:$0xff]
    %v193 = vld [vmem:[#allocation5 + $0x2e8] sm:$0xff]
    %v194 = vld [vmem:[#allocation5 + $0x2f0] sm:$0xff]
    %v195 = vld [vmem:[#allocation5 + $0x2f8] sm:$0xff]
    %v196 = vld [vmem:[#allocation5 + $0x300] sm:$0xff]
    %v197 = vld [vmem:[#allocation5 + $0x308] sm:$0xff]
    %v198 = vld [vmem:[#allocation5 + $0x310] sm:$0xff]
    %v199 = vld [vmem:[#allocation5 + $0x318] sm:$0xff]
    %v200 = vld [vmem:[#allocation5 + $0x320] sm:$0xff]
    %v201 = vld [vmem:[#allocation5 + $0x328] sm:$0xff]
    %v202 = vld [vmem:[#allocation5 + $0x330] sm:$0xff]
    %v203 = vld [vmem:[#allocation5 + $0x338] sm:$0xff]
    %v204 = vld [vmem:[#allocation5 + $0x340] sm:$0xff]
    %v205 = vld [vmem:[#allocation5 + $0x348] sm:$0xff]
    %v206 = vld [vmem:[#allocation5 + $0x350] sm:$0xff]
    %v207 = vld [vmem:[#allocation5 + $0x358] sm:$0xff]
    %v208 = vld [vmem:[#allocation5 + $0x360] sm:$0xff]
    %v209 = vld [vmem:[#allocation5 + $0x368] sm:$0xff]
    %v210 = vld [vmem:[#allocation5 + $0x370] sm:$0xff]
    %v211 = vld [vmem:[#allocation5 + $0x378] sm:$0xff]
    %v212 = vld [vmem:[#allocation5 + $0x380] sm:$0xff]
    %v213 = vld [vmem:[#allocation5 + $0x388] sm:$0xff]
    %v214 = vld [vmem:[#allocation5 + $0x390] sm:$0xff]
    %v215 = vld [vmem:[#allocation5 + $0x398] sm:$0xff]
    %v216 = vld [vmem:[#allocation5 + $0x3a0] sm:$0xff]
    %v217 = vld [vmem:[#allocation5 + $0x3a8] sm:$0xff]
    %v218 = vld [vmem:[#allocation5 + $0x3b0] sm:$0xff]
    %v219 = vld [vmem:[#allocation5 + $0x3b8] sm:$0xff]
    %v220 = vld [vmem:[#allocation5 + $0x3c0] sm:$0xff]
    %v221 = vld [vmem:[#allocation5 + $0x3c8] sm:$0xff]
    %v222 = vld [vmem:[#allocation5 + $0x3d0] sm:$0xff]
    %v223 = vld [vmem:[#allocation5 + $0x3d8] sm:$0xff]
    %v224 = vld [vmem:[#allocation5 + $0x3e0] sm:$0xff]
    %v225 = vld [vmem:[#allocation5 + $0x3e8] sm:$0xff]
    %v226 = vld [vmem:[#allocation5 + $0x3f0] sm:$0xff]
    %v227 = vld [vmem:[#allocation5 + $0x3f8] sm:$0xff]
    %v228 = vld [vmem:[#allocation5 + $0x400] sm:$0xff]
    %v229 = vld [vmem:[#allocation5 + $0x408] sm:$0xff]
    %v230 = vld [vmem:[#allocation5 + $0x410] sm:$0xff]
    %v231 = vld [vmem:[#allocation5 + $0x418] sm:$0xff]
    %v232 = vld [vmem:[#allocation5 + $0x420] sm:$0xff]
    %v233 = vld [vmem:[#allocation5 + $0x428] sm:$0xff]
    %v234 = vld [vmem:[#allocation5 + $0x430] sm:$0xff]
    %v235 = vld [vmem:[#allocation5 + $0x438] sm:$0xff]
    %v236 = vld [vmem:[#allocation5 + $0x440] sm:$0xff]
    %v237 = vld [vmem:[#allocation5 + $0x448] sm:$0xff]
    %v238 = vld [vmem:[#allocation5 + $0x450] sm:$0xff]
    %v239 = vld [vmem:[#allocation5 + $0x458] sm:$0xff]
    %v240 = vld [vmem:[#allocation5 + $0x460] sm:$0xff]
    %v241 = vld [vmem:[#allocation5 + $0x468] sm:$0xff]
    %v242 = vld [vmem:[#allocation5 + $0x470] sm:$0xff]
    %v243 = vld [vmem:[#allocation5 + $0x478] sm:$0xff]
    %v244 = vld [vmem:[#allocation5 + $0x480] sm:$0xff]
    %v245 = vld [vmem:[#allocation5 + $0x488] sm:$0xff]
    %v246 = vld [vmem:[#allocation5 + $0x490] sm:$0xff]
    %v247 = vld [vmem:[#allocation5 + $0x498] sm:$0xff]
    %v248 = vld [vmem:[#allocation5 + $0x4a0] sm:$0xff]
    %v249 = vld [vmem:[#allocation5 + $0x4a8] sm:$0xff]
    %v250 = vld [vmem:[#allocation5 + $0x4b0] sm:$0xff]
    %v251 = vld [vmem:[#allocation5 + $0x4b8] sm:$0xff]
    %v252 = vld [vmem:[#allocation5 + $0x4c0] sm:$0xff]
    %v253 = vld [vmem:[#allocation5 + $0x4c8] sm:$0xff]
    %v254 = vld [vmem:[#allocation5 + $0x4d0] sm:$0xff]
    %v255 = vld [vmem:[#allocation5 + $0x4d8] sm:$0xff]
    %v256 = vld [vmem:[#allocation5 + $0x4e0] sm:$0xff]
    %v257 = vld [vmem:[#allocation5 + $0x4e8] sm:$0xff]
    %v258 = vld [vmem:[#allocation5 + $0x4f0] sm:$0xff]
    %v259 = vld [vmem:[#allocation5 + $0x4f8] sm:$0xff]
    %v260 = vld [vmem:[#allocation5 + $0x500] sm:$0xff]
    %v261 = vld [vmem:[#allocation5 + $0x508] sm:$0xff]
    %v262 = vld [vmem:[#allocation5 + $0x510] sm:$0xff]
    %v263 = vld [vmem:[#allocation5 + $0x518] sm:$0xff]
    %v264 = vld [vmem:[#allocation5 + $0x520] sm:$0xff]
    %v265 = vld [vmem:[#allocation5 + $0x528] sm:$0xff]
    %v266 = vld [vmem:[#allocation5 + $0x530] sm:$0xff]
    %v267 = vld [vmem:[#allocation5 + $0x538] sm:$0xff]
    %v268 = vld [vmem:[#allocation5 + $0x540] sm:$0xff]
    %v269 = vld [vmem:[#allocation5 + $0x548] sm:$0xff]
    %v270 = vld [vmem:[#allocation5 + $0x550] sm:$0xff]
    %v271 = vld [vmem:[#allocation5 + $0x558] sm:$0xff]
    %v272 = vld [vmem:[#allocation5 + $0x560] sm:$0xff]
    %v273 = vld [vmem:[#allocation5 + $0x568] sm:$0xff]
    %v274 = vld [vmem:[#allocation5 + $0x570] sm:$0xff]
    %v275 = vld [vmem:[#allocation5 + $0x578] sm:$0xff]
    %v276 = vld [vmem:[#allocation5 + $0x580] sm:$0xff]
    %v277 = vld [vmem:[#allocation5 + $0x588] sm:$0xff]
    %v278 = vld [vmem:[#allocation5 + $0x590] sm:$0xff]
    %v279 = vld [vmem:[#allocation5 + $0x598] sm:$0xff]
    %v280 = vld [vmem:[#allocation5 + $0x5a0] sm:$0xff]
    %v281 = vld [vmem:[#allocation5 + $0x5a8] sm:$0xff]
    %v282 = vld [vmem:[#allocation5 + $0x5b0] sm:$0xff]
    %v283 = vld [vmem:[#allocation5 + $0x5b8] sm:$0xff]
    %v284 = vld [vmem:[#allocation5 + $0x5c0] sm:$0xff]
    %v285 = vld [vmem:[#allocation5 + $0x5c8] sm:$0xff]
    %v286 = vld [vmem:[#allocation5 + $0x5d0] sm:$0xff]
    %v287 = vld [vmem:[#allocation5 + $0x5d8] sm:$0xff]
    %v288 = vld [vmem:[#allocation5 + $0x5e0] sm:$0xff]
    %v289 = vld [vmem:[#allocation5 + $0x5e8] sm:$0xff]
    %v290 = vld [vmem:[#allocation5 + $0x5f0] sm:$0xff]
    %v291 = vld [vmem:[#allocation5 + $0x5f8] sm:$0xff]
    %v292 = vld [vmem:[#allocation5 + $0x600] sm:$0xff]
    %v293 = vld [vmem:[#allocation5 + $0x608] sm:$0xff]
    %v294 = vld [vmem:[#allocation5 + $0x610] sm:$0xff]
    %v295 = vld [vmem:[#allocation5 + $0x618] sm:$0xff]
    %v296 = vld [vmem:[#allocation5 + $0x620] sm:$0xff]
    %v297 = vld [vmem:[#allocation5 + $0x628] sm:$0xff]
    %v298 = vld [vmem:[#allocation5 + $0x630] sm:$0xff]
    %v299 = vld [vmem:[#allocation5 + $0x638] sm:$0xff]
    %v300 = vld [vmem:[#allocation5 + $0x640] sm:$0xff]
    %v301 = vld [vmem:[#allocation5 + $0x648] sm:$0xff]
    %v302 = vld [vmem:[#allocation5 + $0x650] sm:$0xff]
    %v303 = vld [vmem:[#allocation5 + $0x658] sm:$0xff]
    %v304 = vld [vmem:[#allocation5 + $0x660] sm:$0xff]
    %v305 = vld [vmem:[#allocation5 + $0x668] sm:$0xff]
    %v306 = vld [vmem:[#allocation5 + $0x670] sm:$0xff]
    %v307 = vld [vmem:[#allocation5 + $0x678] sm:$0xff]
    %v308 = vld [vmem:[#allocation5 + $0x680] sm:$0xff]
    %v309 = vld [vmem:[#allocation5 + $0x688] sm:$0xff]
    %v310 = vld [vmem:[#allocation5 + $0x690] sm:$0xff]
    %v311 = vld [vmem:[#allocation5 + $0x698] sm:$0xff]
    %v312 = vld [vmem:[#allocation5 + $0x6a0] sm:$0xff]
    %v313 = vld [vmem:[#allocation5 + $0x6a8] sm:$0xff]
    %v314 = vld [vmem:[#allocation5 + $0x6b0] sm:$0xff]
    %v315 = vld [vmem:[#allocation5 + $0x6b8] sm:$0xff]
    %v316 = vld [vmem:[#allocation5 + $0x6c0] sm:$0xff]
    %v317 = vld [vmem:[#allocation5 + $0x6c8] sm:$0xff]
    %v318 = vld [vmem:[#allocation5 + $0x6d0] sm:$0xff]
    %v319 = vld [vmem:[#allocation5 + $0x6d8] sm:$0xff]
    %v320 = vld [vmem:[#allocation5 + $0x6e0] sm:$0xff]
    %v321 = vld [vmem:[#allocation5 + $0x6e8] sm:$0xff]
    %v322 = vld [vmem:[#allocation5 + $0x6f0] sm:$0xff]
    %v323 = vld [vmem:[#allocation5 + $0x6f8] sm:$0xff]
    %v324 = vld [vmem:[#allocation5 + $0x700] sm:$0xff]
    %v325 = vld [vmem:[#allocation5 + $0x708] sm:$0xff]
    %v326 = vld [vmem:[#allocation5 + $0x710] sm:$0xff]
    %v327 = vld [vmem:[#allocation5 + $0x718] sm:$0xff]
    %v328 = vld [vmem:[#allocation5 + $0x720] sm:$0xff]
    %v329 = vld [vmem:[#allocation5 + $0x728] sm:$0xff]
    %v330 = vld [vmem:[#allocation5 + $0x730] sm:$0xff]
    %v331 = vld [vmem:[#allocation5 + $0x738] sm:$0xff]
    %v332 = vld [vmem:[#allocation5 + $0x740] sm:$0xff]
    %v333 = vld [vmem:[#allocation5 + $0x748] sm:$0xff]
    %v334 = vld [vmem:[#allocation5 + $0x750] sm:$0xff]
    %v335 = vld [vmem:[#allocation5 + $0x758] sm:$0xff]
    %v336 = vld [vmem:[#allocation5 + $0x760] sm:$0xff]
    %v337 = vld [vmem:[#allocation5 + $0x768] sm:$0xff]
    %v338 = vld [vmem:[#allocation5 + $0x770] sm:$0xff]
    %v339 = vld [vmem:[#allocation5 + $0x778] sm:$0xff]
    %v340 = vld [vmem:[#allocation5 + $0x780] sm:$0xff]
    %v341 = vld [vmem:[#allocation5 + $0x788] sm:$0xff]
    %v342 = vld [vmem:[#allocation5 + $0x790] sm:$0xff]
    %v343 = vld [vmem:[#allocation5 + $0x798] sm:$0xff]
    %v344 = vld [vmem:[#allocation5 + $0x7a0] sm:$0xff]
    %v345 = vld [vmem:[#allocation5 + $0x7a8] sm:$0xff]
    %v346 = vld [vmem:[#allocation5 + $0x7b0] sm:$0xff]
    %v347 = vld [vmem:[#allocation5 + $0x7b8] sm:$0xff]
    %v348 = vld [vmem:[#allocation5 + $0x7c0] sm:$0xff]
    %v349 = vld [vmem:[#allocation5 + $0x7c8] sm:$0xff]
    %v350 = vld [vmem:[#allocation5 + $0x7d0] sm:$0xff]
    %v351 = vld [vmem:[#allocation5 + $0x7d8] sm:$0xff]
    %v352 = vld [vmem:[#allocation5 + $0x7e0] sm:$0xff]
    %v353 = vld [vmem:[#allocation5 + $0x7e8] sm:$0xff]
    %v354 = vld [vmem:[#allocation5 + $0x7f0] sm:$0xff]
    %v355 = vld [vmem:[#allocation5 + $0x7f8] sm:$0xff]
    %v357 = vlaneseq
    %v358 = vshrl.u32 %v357, 7
    %v359 = vsub.s32 0, %v358
    %v360 = vrot.slane %v88, %v359
    %v361 = vlaneseq
    %v362 = vshrl.u32 %v361, 7
    %v363 = vsub.s32 1, %v362
    %v364 = vrot.slane %v88, %v363
    %v365 = vlaneseq
    %v366 = vshrl.u32 %v365, 7
    %v367 = vsub.s32 2, %v366
    %v368 = vrot.slane %v88, %v367
    %v369 = vlaneseq
    %v370 = vshrl.u32 %v369, 7
    %v371 = vsub.s32 3, %v370
    %v372 = vrot.slane %v88, %v371
    %v385 = vunpack.c.l.b16 %v92
    %v386 = vunpack.c.h.b16 %v92
    %v387 = vunpack.c.l.b16 %v93
    %v388 = vunpack.c.h.b16 %v93
    %v389 = vunpack.c.l.b16 %v94
    %v390 = vunpack.c.h.b16 %v94
    %v391 = vunpack.c.l.b16 %v95
    %v392 = vunpack.c.h.b16 %v95
    %v393 = vunpack.c.l.b16 %v96
    %v394 = vunpack.c.h.b16 %v96
    %v395 = vunpack.c.l.b16 %v97
    %v396 = vunpack.c.h.b16 %v97
    %v397 = vunpack.c.l.b16 %v98
    %v398 = vunpack.c.h.b16 %v98
    %v399 = vunpack.c.l.b16 %v99
    %v400 = vunpack.c.h.b16 %v99
    %v401 = vpack.c.b16 %v393, %v385
    %v402 = vpack.c.b16 %v394, %v386
    %v403 = vpack.c.b16 %v395, %v387
    %v404 = vpack.c.b16 %v396, %v388
    %v405 = vpack.c.b16 %v397, %v389
    %v406 = vpack.c.b16 %v398, %v390
    %v407 = vpack.c.b16 %v399, %v391
    %v408 = vpack.c.b16 %v400, %v392
    %v673 = vunpack.c.l.b16 %v100
    %v674 = vunpack.c.h.b16 %v100
    %v675 = vunpack.c.l.b16 %v101
    %v676 = vunpack.c.h.b16 %v101
    %v677 = vunpack.c.l.b16 %v102
    %v678 = vunpack.c.h.b16 %v102
    %v679 = vunpack.c.l.b16 %v103
    %v680 = vunpack.c.h.b16 %v103
    %v681 = vunpack.c.l.b16 %v104
    %v682 = vunpack.c.h.b16 %v104
    %v683 = vunpack.c.l.b16 %v105
    %v684 = vunpack.c.h.b16 %v105
    %v685 = vunpack.c.l.b16 %v106
    %v686 = vunpack.c.h.b16 %v106
    %v687 = vunpack.c.l.b16 %v107
    %v688 = vunpack.c.h.b16 %v107
    %v689 = vunpack.c.l.b16 %v108
    %v690 = vunpack.c.h.b16 %v108
    %v691 = vunpack.c.l.b16 %v109
    %v692 = vunpack.c.h.b16 %v109
    %v693 = vunpack.c.l.b16 %v110
    %v694 = vunpack.c.h.b16 %v110
    %v695 = vunpack.c.l.b16 %v111
    %v696 = vunpack.c.h.b16 %v111
    %v697 = vunpack.c.l.b16 %v112
    %v698 = vunpack.c.h.b16 %v112
    %v699 = vunpack.c.l.b16 %v113
    %v700 = vunpack.c.h.b16 %v113
    %v701 = vunpack.c.l.b16 %v114
    %v702 = vunpack.c.h.b16 %v114
    %v703 = vunpack.c.l.b16 %v115
    %v704 = vunpack.c.h.b16 %v115
    %v705 = vunpack.c.l.b16 %v116
    %v706 = vunpack.c.h.b16 %v116
    %v707 = vunpack.c.l.b16 %v117
    %v708 = vunpack.c.h.b16 %v117
    %v709 = vunpack.c.l.b16 %v118
    %v710 = vunpack.c.h.b16 %v118
    %v711 = vunpack.c.l.b16 %v119
    %v712 = vunpack.c.h.b16 %v119
    %v713 = vunpack.c.l.b16 %v120
    %v714 = vunpack.c.h.b16 %v120
    %v715 = vunpack.c.l.b16 %v121
    %v716 = vunpack.c.h.b16 %v121
    %v717 = vunpack.c.l.b16 %v122
    %v718 = vunpack.c.h.b16 %v122
    %v719 = vunpack.c.l.b16 %v123
    %v720 = vunpack.c.h.b16 %v123
    %v721 = vunpack.c.l.b16 %v124
    %v722 = vunpack.c.h.b16 %v124
    %v723 = vunpack.c.l.b16 %v125
    %v724 = vunpack.c.h.b16 %v125
    %v725 = vunpack.c.l.b16 %v126
    %v726 = vunpack.c.h.b16 %v126
    %v727 = vunpack.c.l.b16 %v127
    %v728 = vunpack.c.h.b16 %v127
    %v729 = vunpack.c.l.b16 %v128
    %v730 = vunpack.c.h.b16 %v128
    %v731 = vunpack.c.l.b16 %v129
    %v732 = vunpack.c.h.b16 %v129
    %v733 = vunpack.c.l.b16 %v130
    %v734 = vunpack.c.h.b16 %v130
    %v735 = vunpack.c.l.b16 %v131
    %v736 = vunpack.c.h.b16 %v131
    %v737 = vunpack.c.l.b16 %v132
    %v738 = vunpack.c.h.b16 %v132
    %v739 = vunpack.c.l.b16 %v133
    %v740 = vunpack.c.h.b16 %v133
    %v741 = vunpack.c.l.b16 %v134
    %v742 = vunpack.c.h.b16 %v134
    %v743 = vunpack.c.l.b16 %v135
    %v744 = vunpack.c.h.b16 %v135
    %v745 = vunpack.c.l.b16 %v136
    %v746 = vunpack.c.h.b16 %v136
    %v747 = vunpack.c.l.b16 %v137
    %v748 = vunpack.c.h.b16 %v137
    %v749 = vunpack.c.l.b16 %v138
    %v750 = vunpack.c.h.b16 %v138
    %v751 = vunpack.c.l.b16 %v139
    %v752 = vunpack.c.h.b16 %v139
    %v753 = vunpack.c.l.b16 %v140
    %v754 = vunpack.c.h.b16 %v140
    %v755 = vunpack.c.l.b16 %v141
    %v756 = vunpack.c.h.b16 %v141
    %v757 = vunpack.c.l.b16 %v142
    %v758 = vunpack.c.h.b16 %v142
    %v759 = vunpack.c.l.b16 %v143
    %v760 = vunpack.c.h.b16 %v143
    %v761 = vunpack.c.l.b16 %v144
    %v762 = vunpack.c.h.b16 %v144
    %v763 = vunpack.c.l.b16 %v145
    %v764 = vunpack.c.h.b16 %v145
    %v765 = vunpack.c.l.b16 %v146
    %v766 = vunpack.c.h.b16 %v146
    %v767 = vunpack.c.l.b16 %v147
    %v768 = vunpack.c.h.b16 %v147
    %v769 = vunpack.c.l.b16 %v148
    %v770 = vunpack.c.h.b16 %v148
    %v771 = vunpack.c.l.b16 %v149
    %v772 = vunpack.c.h.b16 %v149
    %v773 = vunpack.c.l.b16 %v150
    %v774 = vunpack.c.h.b16 %v150
    %v775 = vunpack.c.l.b16 %v151
    %v776 = vunpack.c.h.b16 %v151
    %v777 = vunpack.c.l.b16 %v152
    %v778 = vunpack.c.h.b16 %v152
    %v779 = vunpack.c.l.b16 %v153
    %v780 = vunpack.c.h.b16 %v153
    %v781 = vunpack.c.l.b16 %v154
    %v782 = vunpack.c.h.b16 %v154
    %v783 = vunpack.c.l.b16 %v155
    %v784 = vunpack.c.h.b16 %v155
    %v785 = vunpack.c.l.b16 %v156
    %v786 = vunpack.c.h.b16 %v156
    %v787 = vunpack.c.l.b16 %v157
    %v788 = vunpack.c.h.b16 %v157
    %v789 = vunpack.c.l.b16 %v158
    %v790 = vunpack.c.h.b16 %v158
    %v791 = vunpack.c.l.b16 %v159
    %v792 = vunpack.c.h.b16 %v159
    %v793 = vunpack.c.l.b16 %v160
    %v794 = vunpack.c.h.b16 %v160
    %v795 = vunpack.c.l.b16 %v161
    %v796 = vunpack.c.h.b16 %v161
    %v797 = vunpack.c.l.b16 %v162
    %v798 = vunpack.c.h.b16 %v162
    %v799 = vunpack.c.l.b16 %v163
    %v800 = vunpack.c.h.b16 %v163
    %v801 = vunpack.c.l.b16 %v164
    %v802 = vunpack.c.h.b16 %v164
    %v803 = vunpack.c.l.b16 %v165
    %v804 = vunpack.c.h.b16 %v165
    %v805 = vunpack.c.l.b16 %v166
    %v806 = vunpack.c.h.b16 %v166
    %v807 = vunpack.c.l.b16 %v167
    %v808 = vunpack.c.h.b16 %v167
    %v809 = vunpack.c.l.b16 %v168
    %v810 = vunpack.c.h.b16 %v168
    %v811 = vunpack.c.l.b16 %v169
    %v812 = vunpack.c.h.b16 %v169
    %v813 = vunpack.c.l.b16 %v170
    %v814 = vunpack.c.h.b16 %v170
    %v815 = vunpack.c.l.b16 %v171
    %v816 = vunpack.c.h.b16 %v171
    %v817 = vunpack.c.l.b16 %v172
    %v818 = vunpack.c.h.b16 %v172
    %v819 = vunpack.c.l.b16 %v173
    %v820 = vunpack.c.h.b16 %v173
    %v821 = vunpack.c.l.b16 %v174
    %v822 = vunpack.c.h.b16 %v174
    %v823 = vunpack.c.l.b16 %v175
    %v824 = vunpack.c.h.b16 %v175
    %v825 = vunpack.c.l.b16 %v176
    %v826 = vunpack.c.h.b16 %v176
    %v827 = vunpack.c.l.b16 %v177
    %v828 = vunpack.c.h.b16 %v177
    %v829 = vunpack.c.l.b16 %v178
    %v830 = vunpack.c.h.b16 %v178
    %v831 = vunpack.c.l.b16 %v179
    %v832 = vunpack.c.h.b16 %v179
    %v833 = vunpack.c.l.b16 %v180
    %v834 = vunpack.c.h.b16 %v180
    %v835 = vunpack.c.l.b16 %v181
    %v836 = vunpack.c.h.b16 %v181
    %v837 = vunpack.c.l.b16 %v182
    %v838 = vunpack.c.h.b16 %v182
    %v839 = vunpack.c.l.b16 %v183
    %v840 = vunpack.c.h.b16 %v183
    %v841 = vunpack.c.l.b16 %v184
    %v842 = vunpack.c.h.b16 %v184
    %v843 = vunpack.c.l.b16 %v185
    %v844 = vunpack.c.h.b16 %v185
    %v845 = vunpack.c.l.b16 %v186
    %v846 = vunpack.c.h.b16 %v186
    %v847 = vunpack.c.l.b16 %v187
    %v848 = vunpack.c.h.b16 %v187
    %v849 = vunpack.c.l.b16 %v188
    %v850 = vunpack.c.h.b16 %v188
    %v851 = vunpack.c.l.b16 %v189
    %v852 = vunpack.c.h.b16 %v189
    %v853 = vunpack.c.l.b16 %v190
    %v854 = vunpack.c.h.b16 %v190
    %v855 = vunpack.c.l.b16 %v191
    %v856 = vunpack.c.h.b16 %v191
    %v857 = vunpack.c.l.b16 %v192
    %v858 = vunpack.c.h.b16 %v192
    %v859 = vunpack.c.l.b16 %v193
    %v860 = vunpack.c.h.b16 %v193
    %v861 = vunpack.c.l.b16 %v194
    %v862 = vunpack.c.h.b16 %v194
    %v863 = vunpack.c.l.b16 %v195
    %v864 = vunpack.c.h.b16 %v195
    %v865 = vunpack.c.l.b16 %v196
    %v866 = vunpack.c.h.b16 %v196
    %v867 = vunpack.c.l.b16 %v197
    %v868 = vunpack.c.h.b16 %v197
    %v869 = vunpack.c.l.b16 %v198
    %v870 = vunpack.c.h.b16 %v198
    %v871 = vunpack.c.l.b16 %v199
    %v872 = vunpack.c.h.b16 %v199
    %v873 = vunpack.c.l.b16 %v200
    %v874 = vunpack.c.h.b16 %v200
    %v875 = vunpack.c.l.b16 %v201
    %v876 = vunpack.c.h.b16 %v201
    %v877 = vunpack.c.l.b16 %v202
    %v878 = vunpack.c.h.b16 %v202
    %v879 = vunpack.c.l.b16 %v203
    %v880 = vunpack.c.h.b16 %v203
    %v881 = vunpack.c.l.b16 %v204
    %v882 = vunpack.c.h.b16 %v204
    %v883 = vunpack.c.l.b16 %v205
    %v884 = vunpack.c.h.b16 %v205
    %v885 = vunpack.c.l.b16 %v206
    %v886 = vunpack.c.h.b16 %v206
    %v887 = vunpack.c.l.b16 %v207
    %v888 = vunpack.c.h.b16 %v207
    %v889 = vunpack.c.l.b16 %v208
    %v890 = vunpack.c.h.b16 %v208
    %v891 = vunpack.c.l.b16 %v209
    %v892 = vunpack.c.h.b16 %v209
    %v893 = vunpack.c.l.b16 %v210
    %v894 = vunpack.c.h.b16 %v210
    %v895 = vunpack.c.l.b16 %v211
    %v896 = vunpack.c.h.b16 %v211
    %v897 = vunpack.c.l.b16 %v212
    %v898 = vunpack.c.h.b16 %v212
    %v899 = vunpack.c.l.b16 %v213
    %v900 = vunpack.c.h.b16 %v213
    %v901 = vunpack.c.l.b16 %v214
    %v902 = vunpack.c.h.b16 %v214
    %v903 = vunpack.c.l.b16 %v215
    %v904 = vunpack.c.h.b16 %v215
    %v905 = vunpack.c.l.b16 %v216
    %v906 = vunpack.c.h.b16 %v216
    %v907 = vunpack.c.l.b16 %v217
    %v908 = vunpack.c.h.b16 %v217
    %v909 = vunpack.c.l.b16 %v218
    %v910 = vunpack.c.h.b16 %v218
    %v911 = vunpack.c.l.b16 %v219
    %v912 = vunpack.c.h.b16 %v219
    %v913 = vunpack.c.l.b16 %v220
    %v914 = vunpack.c.h.b16 %v220
    %v915 = vunpack.c.l.b16 %v221
    %v916 = vunpack.c.h.b16 %v221
    %v917 = vunpack.c.l.b16 %v222
    %v918 = vunpack.c.h.b16 %v222
    %v919 = vunpack.c.l.b16 %v223
    %v920 = vunpack.c.h.b16 %v223
    %v921 = vunpack.c.l.b16 %v224
    %v922 = vunpack.c.h.b16 %v224
    %v923 = vunpack.c.l.b16 %v225
    %v924 = vunpack.c.h.b16 %v225
    %v925 = vunpack.c.l.b16 %v226
    %v926 = vunpack.c.h.b16 %v226
    %v927 = vunpack.c.l.b16 %v227
    %v928 = vunpack.c.h.b16 %v227
    %v929 = vunpack.c.l.b16 %v228
    %v930 = vunpack.c.h.b16 %v228
    %v931 = vunpack.c.l.b16 %v229
    %v932 = vunpack.c.h.b16 %v229
    %v933 = vunpack.c.l.b16 %v230
    %v934 = vunpack.c.h.b16 %v230
    %v935 = vunpack.c.l.b16 %v231
    %v936 = vunpack.c.h.b16 %v231
    %v937 = vunpack.c.l.b16 %v232
    %v938 = vunpack.c.h.b16 %v232
    %v939 = vunpack.c.l.b16 %v233
    %v940 = vunpack.c.h.b16 %v233
    %v941 = vunpack.c.l.b16 %v234
    %v942 = vunpack.c.h.b16 %v234
    %v943 = vunpack.c.l.b16 %v235
    %v944 = vunpack.c.h.b16 %v235
    %v945 = vunpack.c.l.b16 %v236
    %v946 = vunpack.c.h.b16 %v236
    %v947 = vunpack.c.l.b16 %v237
    %v948 = vunpack.c.h.b16 %v237
    %v949 = vunpack.c.l.b16 %v238
    %v950 = vunpack.c.h.b16 %v238
    %v951 = vunpack.c.l.b16 %v239
    %v952 = vunpack.c.h.b16 %v239
    %v953 = vunpack.c.l.b16 %v240
    %v954 = vunpack.c.h.b16 %v240
    %v955 = vunpack.c.l.b16 %v241
    %v956 = vunpack.c.h.b16 %v241
    %v957 = vunpack.c.l.b16 %v242
    %v958 = vunpack.c.h.b16 %v242
    %v959 = vunpack.c.l.b16 %v243
    %v960 = vunpack.c.h.b16 %v243
    %v961 = vunpack.c.l.b16 %v244
    %v962 = vunpack.c.h.b16 %v244
    %v963 = vunpack.c.l.b16 %v245
    %v964 = vunpack.c.h.b16 %v245
    %v965 = vunpack.c.l.b16 %v246
    %v966 = vunpack.c.h.b16 %v246
    %v967 = vunpack.c.l.b16 %v247
    %v968 = vunpack.c.h.b16 %v247
    %v969 = vunpack.c.l.b16 %v248
    %v970 = vunpack.c.h.b16 %v248
    %v971 = vunpack.c.l.b16 %v249
    %v972 = vunpack.c.h.b16 %v249
    %v973 = vunpack.c.l.b16 %v250
    %v974 = vunpack.c.h.b16 %v250
    %v975 = vunpack.c.l.b16 %v251
    %v976 = vunpack.c.h.b16 %v251
    %v977 = vunpack.c.l.b16 %v252
    %v978 = vunpack.c.h.b16 %v252
    %v979 = vunpack.c.l.b16 %v253
    %v980 = vunpack.c.h.b16 %v253
    %v981 = vunpack.c.l.b16 %v254
    %v982 = vunpack.c.h.b16 %v254
    %v983 = vunpack.c.l.b16 %v255
    %v984 = vunpack.c.h.b16 %v255
    %v985 = vunpack.c.l.b16 %v256
    %v986 = vunpack.c.h.b16 %v256
    %v987 = vunpack.c.l.b16 %v257
    %v988 = vunpack.c.h.b16 %v257
    %v989 = vunpack.c.l.b16 %v258
    %v990 = vunpack.c.h.b16 %v258
    %v991 = vunpack.c.l.b16 %v259
    %v992 = vunpack.c.h.b16 %v259
    %v993 = vunpack.c.l.b16 %v260
    %v994 = vunpack.c.h.b16 %v260
    %v995 = vunpack.c.l.b16 %v261
    %v996 = vunpack.c.h.b16 %v261
    %v997 = vunpack.c.l.b16 %v262
    %v998 = vunpack.c.h.b16 %v262
    %v999 = vunpack.c.l.b16 %v263
    %v1000 = vunpack.c.h.b16 %v263
    %v1001 = vunpack.c.l.b16 %v264
    %v1002 = vunpack.c.h.b16 %v264
    %v1003 = vunpack.c.l.b16 %v265
    %v1004 = vunpack.c.h.b16 %v265
    %v1005 = vunpack.c.l.b16 %v266
    %v1006 = vunpack.c.h.b16 %v266
    %v1007 = vunpack.c.l.b16 %v267
    %v1008 = vunpack.c.h.b16 %v267
    %v1009 = vunpack.c.l.b16 %v268
    %v1010 = vunpack.c.h.b16 %v268
    %v1011 = vunpack.c.l.b16 %v269
    %v1012 = vunpack.c.h.b16 %v269
    %v1013 = vunpack.c.l.b16 %v270
    %v1014 = vunpack.c.h.b16 %v270
    %v1015 = vunpack.c.l.b16 %v271
    %v1016 = vunpack.c.h.b16 %v271
    %v1017 = vunpack.c.l.b16 %v272
    %v1018 = vunpack.c.h.b16 %v272
    %v1019 = vunpack.c.l.b16 %v273
    %v1020 = vunpack.c.h.b16 %v273
    %v1021 = vunpack.c.l.b16 %v274
    %v1022 = vunpack.c.h.b16 %v274
    %v1023 = vunpack.c.l.b16 %v275
    %v1024 = vunpack.c.h.b16 %v275
    %v1025 = vunpack.c.l.b16 %v276
    %v1026 = vunpack.c.h.b16 %v276
    %v1027 = vunpack.c.l.b16 %v277
    %v1028 = vunpack.c.h.b16 %v277
    %v1029 = vunpack.c.l.b16 %v278
    %v1030 = vunpack.c.h.b16 %v278
    %v1031 = vunpack.c.l.b16 %v279
    %v1032 = vunpack.c.h.b16 %v279
    %v1033 = vunpack.c.l.b16 %v280
    %v1034 = vunpack.c.h.b16 %v280
    %v1035 = vunpack.c.l.b16 %v281
    %v1036 = vunpack.c.h.b16 %v281
    %v1037 = vunpack.c.l.b16 %v282
    %v1038 = vunpack.c.h.b16 %v282
    %v1039 = vunpack.c.l.b16 %v283
    %v1040 = vunpack.c.h.b16 %v283
    %v1041 = vunpack.c.l.b16 %v284
    %v1042 = vunpack.c.h.b16 %v284
    %v1043 = vunpack.c.l.b16 %v285
    %v1044 = vunpack.c.h.b16 %v285
    %v1045 = vunpack.c.l.b16 %v286
    %v1046 = vunpack.c.h.b16 %v286
    %v1047 = vunpack.c.l.b16 %v287
    %v1048 = vunpack.c.h.b16 %v287
    %v1049 = vunpack.c.l.b16 %v288
    %v1050 = vunpack.c.h.b16 %v288
    %v1051 = vunpack.c.l.b16 %v289
    %v1052 = vunpack.c.h.b16 %v289
    %v1053 = vunpack.c.l.b16 %v290
    %v1054 = vunpack.c.h.b16 %v290
    %v1055 = vunpack.c.l.b16 %v291
    %v1056 = vunpack.c.h.b16 %v291
    %v1057 = vunpack.c.l.b16 %v292
    %v1058 = vunpack.c.h.b16 %v292
    %v1059 = vunpack.c.l.b16 %v293
    %v1060 = vunpack.c.h.b16 %v293
    %v1061 = vunpack.c.l.b16 %v294
    %v1062 = vunpack.c.h.b16 %v294
    %v1063 = vunpack.c.l.b16 %v295
    %v1064 = vunpack.c.h.b16 %v295
    %v1065 = vunpack.c.l.b16 %v296
    %v1066 = vunpack.c.h.b16 %v296
    %v1067 = vunpack.c.l.b16 %v297
    %v1068 = vunpack.c.h.b16 %v297
    %v1069 = vunpack.c.l.b16 %v298
    %v1070 = vunpack.c.h.b16 %v298
    %v1071 = vunpack.c.l.b16 %v299
    %v1072 = vunpack.c.h.b16 %v299
    %v1073 = vunpack.c.l.b16 %v300
    %v1074 = vunpack.c.h.b16 %v300
    %v1075 = vunpack.c.l.b16 %v301
    %v1076 = vunpack.c.h.b16 %v301
    %v1077 = vunpack.c.l.b16 %v302
    %v1078 = vunpack.c.h.b16 %v302
    %v1079 = vunpack.c.l.b16 %v303
    %v1080 = vunpack.c.h.b16 %v303
    %v1081 = vunpack.c.l.b16 %v304
    %v1082 = vunpack.c.h.b16 %v304
    %v1083 = vunpack.c.l.b16 %v305
    %v1084 = vunpack.c.h.b16 %v305
    %v1085 = vunpack.c.l.b16 %v306
    %v1086 = vunpack.c.h.b16 %v306
    %v1087 = vunpack.c.l.b16 %v307
    %v1088 = vunpack.c.h.b16 %v307
    %v1089 = vunpack.c.l.b16 %v308
    %v1090 = vunpack.c.h.b16 %v308
    %v1091 = vunpack.c.l.b16 %v309
    %v1092 = vunpack.c.h.b16 %v309
    %v1093 = vunpack.c.l.b16 %v310
    %v1094 = vunpack.c.h.b16 %v310
    %v1095 = vunpack.c.l.b16 %v311
    %v1096 = vunpack.c.h.b16 %v311
    %v1097 = vunpack.c.l.b16 %v312
    %v1098 = vunpack.c.h.b16 %v312
    %v1099 = vunpack.c.l.b16 %v313
    %v1100 = vunpack.c.h.b16 %v313
    %v1101 = vunpack.c.l.b16 %v314
    %v1102 = vunpack.c.h.b16 %v314
    %v1103 = vunpack.c.l.b16 %v315
    %v1104 = vunpack.c.h.b16 %v315
    %v1105 = vunpack.c.l.b16 %v316
    %v1106 = vunpack.c.h.b16 %v316
    %v1107 = vunpack.c.l.b16 %v317
    %v1108 = vunpack.c.h.b16 %v317
    %v1109 = vunpack.c.l.b16 %v318
    %v1110 = vunpack.c.h.b16 %v318
    %v1111 = vunpack.c.l.b16 %v319
    %v1112 = vunpack.c.h.b16 %v319
    %v1113 = vunpack.c.l.b16 %v320
    %v1114 = vunpack.c.h.b16 %v320
    %v1115 = vunpack.c.l.b16 %v321
    %v1116 = vunpack.c.h.b16 %v321
    %v1117 = vunpack.c.l.b16 %v322
    %v1118 = vunpack.c.h.b16 %v322
    %v1119 = vunpack.c.l.b16 %v323
    %v1120 = vunpack.c.h.b16 %v323
    %v1121 = vunpack.c.l.b16 %v324
    %v1122 = vunpack.c.h.b16 %v324
    %v1123 = vunpack.c.l.b16 %v325
    %v1124 = vunpack.c.h.b16 %v325
    %v1125 = vunpack.c.l.b16 %v326
    %v1126 = vunpack.c.h.b16 %v326
    %v1127 = vunpack.c.l.b16 %v327
    %v1128 = vunpack.c.h.b16 %v327
    %v1129 = vunpack.c.l.b16 %v328
    %v1130 = vunpack.c.h.b16 %v328
    %v1131 = vunpack.c.l.b16 %v329
    %v1132 = vunpack.c.h.b16 %v329
    %v1133 = vunpack.c.l.b16 %v330
    %v1134 = vunpack.c.h.b16 %v330
    %v1135 = vunpack.c.l.b16 %v331
    %v1136 = vunpack.c.h.b16 %v331
    %v1137 = vunpack.c.l.b16 %v332
    %v1138 = vunpack.c.h.b16 %v332
    %v1139 = vunpack.c.l.b16 %v333
    %v1140 = vunpack.c.h.b16 %v333
    %v1141 = vunpack.c.l.b16 %v334
    %v1142 = vunpack.c.h.b16 %v334
    %v1143 = vunpack.c.l.b16 %v335
    %v1144 = vunpack.c.h.b16 %v335
    %v1145 = vunpack.c.l.b16 %v336
    %v1146 = vunpack.c.h.b16 %v336
    %v1147 = vunpack.c.l.b16 %v337
    %v1148 = vunpack.c.h.b16 %v337
    %v1149 = vunpack.c.l.b16 %v338
    %v1150 = vunpack.c.h.b16 %v338
    %v1151 = vunpack.c.l.b16 %v339
    %v1152 = vunpack.c.h.b16 %v339
    %v1153 = vunpack.c.l.b16 %v340
    %v1154 = vunpack.c.h.b16 %v340
    %v1155 = vunpack.c.l.b16 %v341
    %v1156 = vunpack.c.h.b16 %v341
    %v1157 = vunpack.c.l.b16 %v342
    %v1158 = vunpack.c.h.b16 %v342
    %v1159 = vunpack.c.l.b16 %v343
    %v1160 = vunpack.c.h.b16 %v343
    %v1161 = vunpack.c.l.b16 %v344
    %v1162 = vunpack.c.h.b16 %v344
    %v1163 = vunpack.c.l.b16 %v345
    %v1164 = vunpack.c.h.b16 %v345
    %v1165 = vunpack.c.l.b16 %v346
    %v1166 = vunpack.c.h.b16 %v346
    %v1167 = vunpack.c.l.b16 %v347
    %v1168 = vunpack.c.h.b16 %v347
    %v1169 = vunpack.c.l.b16 %v348
    %v1170 = vunpack.c.h.b16 %v348
    %v1171 = vunpack.c.l.b16 %v349
    %v1172 = vunpack.c.h.b16 %v349
    %v1173 = vunpack.c.l.b16 %v350
    %v1174 = vunpack.c.h.b16 %v350
    %v1175 = vunpack.c.l.b16 %v351
    %v1176 = vunpack.c.h.b16 %v351
    %v1177 = vunpack.c.l.b16 %v352
    %v1178 = vunpack.c.h.b16 %v352
    %v1179 = vunpack.c.l.b16 %v353
    %v1180 = vunpack.c.h.b16 %v353
    %v1181 = vunpack.c.l.b16 %v354
    %v1182 = vunpack.c.h.b16 %v354
    %v1183 = vunpack.c.l.b16 %v355
    %v1184 = vunpack.c.h.b16 %v355
    %v1185 = vpack.c.b16 %v677, %v673
    %v1186 = vpack.c.b16 %v678, %v674
    %v1187 = vpack.c.b16 %v679, %v675
    %v1188 = vpack.c.b16 %v680, %v676
    %v1189 = vpack.c.b16 %v685, %v681
    %v1190 = vpack.c.b16 %v686, %v682
    %v1191 = vpack.c.b16 %v687, %v683
    %v1192 = vpack.c.b16 %v688, %v684
    %v1193 = vpack.c.b16 %v693, %v689
    %v1194 = vpack.c.b16 %v694, %v690
    %v1195 = vpack.c.b16 %v695, %v691
    %v1196 = vpack.c.b16 %v696, %v692
    %v1197 = vpack.c.b16 %v701, %v697
    %v1198 = vpack.c.b16 %v702, %v698
    %v1199 = vpack.c.b16 %v703, %v699
    %v1200 = vpack.c.b16 %v704, %v700
    %v1201 = vpack.c.b16 %v709, %v705
    %v1202 = vpack.c.b16 %v710, %v706
    %v1203 = vpack.c.b16 %v711, %v707
    %v1204 = vpack.c.b16 %v712, %v708
    %v1205 = vpack.c.b16 %v717, %v713
    %v1206 = vpack.c.b16 %v718, %v714
    %v1207 = vpack.c.b16 %v719, %v715
    %v1208 = vpack.c.b16 %v720, %v716
    %v1209 = vpack.c.b16 %v725, %v721
    %v1210 = vpack.c.b16 %v726, %v722
    %v1211 = vpack.c.b16 %v727, %v723
    %v1212 = vpack.c.b16 %v728, %v724
    %v1213 = vpack.c.b16 %v733, %v729
    %v1214 = vpack.c.b16 %v734, %v730
    %v1215 = vpack.c.b16 %v735, %v731
    %v1216 = vpack.c.b16 %v736, %v732
    %v1217 = vpack.c.b16 %v741, %v737
    %v1218 = vpack.c.b16 %v742, %v738
    %v1219 = vpack.c.b16 %v743, %v739
    %v1220 = vpack.c.b16 %v744, %v740
    %v1221 = vpack.c.b16 %v749, %v745
    %v1222 = vpack.c.b16 %v750, %v746
    %v1223 = vpack.c.b16 %v751, %v747
    %v1224 = vpack.c.b16 %v752, %v748
    %v1225 = vpack.c.b16 %v757, %v753
    %v1226 = vpack.c.b16 %v758, %v754
    %v1227 = vpack.c.b16 %v759, %v755
    %v1228 = vpack.c.b16 %v760, %v756
    %v1229 = vpack.c.b16 %v765, %v761
    %v1230 = vpack.c.b16 %v766, %v762
    %v1231 = vpack.c.b16 %v767, %v763
    %v1232 = vpack.c.b16 %v768, %v764
    %v1233 = vpack.c.b16 %v773, %v769
    %v1234 = vpack.c.b16 %v774, %v770
    %v1235 = vpack.c.b16 %v775, %v771
    %v1236 = vpack.c.b16 %v776, %v772
    %v1237 = vpack.c.b16 %v781, %v777
    %v1238 = vpack.c.b16 %v782, %v778
    %v1239 = vpack.c.b16 %v783, %v779
    %v1240 = vpack.c.b16 %v784, %v780
    %v1241 = vpack.c.b16 %v789, %v785
    %v1242 = vpack.c.b16 %v790, %v786
    %v1243 = vpack.c.b16 %v791, %v787
    %v1244 = vpack.c.b16 %v792, %v788
    %v1245 = vpack.c.b16 %v797, %v793
    %v1246 = vpack.c.b16 %v798, %v794
    %v1247 = vpack.c.b16 %v799, %v795
    %v1248 = vpack.c.b16 %v800, %v796
    %v1249 = vpack.c.b16 %v805, %v801
    %v1250 = vpack.c.b16 %v806, %v802
    %v1251 = vpack.c.b16 %v807, %v803
    %v1252 = vpack.c.b16 %v808, %v804
    %v1253 = vpack.c.b16 %v813, %v809
    %v1254 = vpack.c.b16 %v814, %v810
    %v1255 = vpack.c.b16 %v815, %v811
    %v1256 = vpack.c.b16 %v816, %v812
    %v1257 = vpack.c.b16 %v821, %v817
    %v1258 = vpack.c.b16 %v822, %v818
    %v1259 = vpack.c.b16 %v823, %v819
    %v1260 = vpack.c.b16 %v824, %v820
    %v1261 = vpack.c.b16 %v829, %v825
    %v1262 = vpack.c.b16 %v830, %v826
    %v1263 = vpack.c.b16 %v831, %v827
    %v1264 = vpack.c.b16 %v832, %v828
    %v1265 = vpack.c.b16 %v837, %v833
    %v1266 = vpack.c.b16 %v838, %v834
    %v1267 = vpack.c.b16 %v839, %v835
    %v1268 = vpack.c.b16 %v840, %v836
    %v1269 = vpack.c.b16 %v845, %v841
    %v1270 = vpack.c.b16 %v846, %v842
    %v1271 = vpack.c.b16 %v847, %v843
    %v1272 = vpack.c.b16 %v848, %v844
    %v1273 = vpack.c.b16 %v853, %v849
    %v1274 = vpack.c.b16 %v854, %v850
    %v1275 = vpack.c.b16 %v855, %v851
    %v1276 = vpack.c.b16 %v856, %v852
    %v1277 = vpack.c.b16 %v861, %v857
    %v1278 = vpack.c.b16 %v862, %v858
    %v1279 = vpack.c.b16 %v863, %v859
    %v1280 = vpack.c.b16 %v864, %v860
    %v1281 = vpack.c.b16 %v869, %v865
    %v1282 = vpack.c.b16 %v870, %v866
    %v1283 = vpack.c.b16 %v871, %v867
    %v1284 = vpack.c.b16 %v872, %v868
    %v1285 = vpack.c.b16 %v877, %v873
    %v1286 = vpack.c.b16 %v878, %v874
    %v1287 = vpack.c.b16 %v879, %v875
    %v1288 = vpack.c.b16 %v880, %v876
    %v1289 = vpack.c.b16 %v885, %v881
    %v1290 = vpack.c.b16 %v886, %v882
    %v1291 = vpack.c.b16 %v887, %v883
    %v1292 = vpack.c.b16 %v888, %v884
    %v1293 = vpack.c.b16 %v893, %v889
    %v1294 = vpack.c.b16 %v894, %v890
    %v1295 = vpack.c.b16 %v895, %v891
    %v1296 = vpack.c.b16 %v896, %v892
    %v1297 = vpack.c.b16 %v901, %v897
    %v1298 = vpack.c.b16 %v902, %v898
    %v1299 = vpack.c.b16 %v903, %v899
    %v1300 = vpack.c.b16 %v904, %v900
    %v1301 = vpack.c.b16 %v909, %v905
    %v1302 = vpack.c.b16 %v910, %v906
    %v1303 = vpack.c.b16 %v911, %v907
    %v1304 = vpack.c.b16 %v912, %v908
    %v1305 = vpack.c.b16 %v917, %v913
    %v1306 = vpack.c.b16 %v918, %v914
    %v1307 = vpack.c.b16 %v919, %v915
    %v1308 = vpack.c.b16 %v920, %v916
    %v1309 = vpack.c.b16 %v925, %v921
    %v1310 = vpack.c.b16 %v926, %v922
    %v1311 = vpack.c.b16 %v927, %v923
    %v1312 = vpack.c.b16 %v928, %v924
    %v1313 = vpack.c.b16 %v933, %v929
    %v1314 = vpack.c.b16 %v934, %v930
    %v1315 = vpack.c.b16 %v935, %v931
    %v1316 = vpack.c.b16 %v936, %v932
    %v1317 = vpack.c.b16 %v941, %v937
    %v1318 = vpack.c.b16 %v942, %v938
    %v1319 = vpack.c.b16 %v943, %v939
    %v1320 = vpack.c.b16 %v944, %v940
    %v1321 = vpack.c.b16 %v949, %v945
    %v1322 = vpack.c.b16 %v950, %v946
    %v1323 = vpack.c.b16 %v951, %v947
    %v1324 = vpack.c.b16 %v952, %v948
    %v1325 = vpack.c.b16 %v957, %v953
    %v1326 = vpack.c.b16 %v958, %v954
    %v1327 = vpack.c.b16 %v959, %v955
    %v1328 = vpack.c.b16 %v960, %v956
    %v1329 = vpack.c.b16 %v965, %v961
    %v1330 = vpack.c.b16 %v966, %v962
    %v1331 = vpack.c.b16 %v967, %v963
    %v1332 = vpack.c.b16 %v968, %v964
    %v1333 = vpack.c.b16 %v973, %v969
    %v1334 = vpack.c.b16 %v974, %v970
    %v1335 = vpack.c.b16 %v975, %v971
    %v1336 = vpack.c.b16 %v976, %v972
    %v1337 = vpack.c.b16 %v981, %v977
    %v1338 = vpack.c.b16 %v982, %v978
    %v1339 = vpack.c.b16 %v983, %v979
    %v1340 = vpack.c.b16 %v984, %v980
    %v1341 = vpack.c.b16 %v989, %v985
    %v1342 = vpack.c.b16 %v990, %v986
    %v1343 = vpack.c.b16 %v991, %v987
    %v1344 = vpack.c.b16 %v992, %v988
    %v1345 = vpack.c.b16 %v997, %v993
    %v1346 = vpack.c.b16 %v998, %v994
    %v1347 = vpack.c.b16 %v999, %v995
    %v1348 = vpack.c.b16 %v1000, %v996
    %v1349 = vpack.c.b16 %v1005, %v1001
    %v1350 = vpack.c.b16 %v1006, %v1002
    %v1351 = vpack.c.b16 %v1007, %v1003
    %v1352 = vpack.c.b16 %v1008, %v1004
    %v1353 = vpack.c.b16 %v1013, %v1009
    %v1354 = vpack.c.b16 %v1014, %v1010
    %v1355 = vpack.c.b16 %v1015, %v1011
    %v1356 = vpack.c.b16 %v1016, %v1012
    %v1357 = vpack.c.b16 %v1021, %v1017
    %v1358 = vpack.c.b16 %v1022, %v1018
    %v1359 = vpack.c.b16 %v1023, %v1019
    %v1360 = vpack.c.b16 %v1024, %v1020
    %v1361 = vpack.c.b16 %v1029, %v1025
    %v1362 = vpack.c.b16 %v1030, %v1026
    %v1363 = vpack.c.b16 %v1031, %v1027
    %v1364 = vpack.c.b16 %v1032, %v1028
    %v1365 = vpack.c.b16 %v1037, %v1033
    %v1366 = vpack.c.b16 %v1038, %v1034
    %v1367 = vpack.c.b16 %v1039, %v1035
    %v1368 = vpack.c.b16 %v1040, %v1036
    %v1369 = vpack.c.b16 %v1045, %v1041
    %v1370 = vpack.c.b16 %v1046, %v1042
    %v1371 = vpack.c.b16 %v1047, %v1043
    %v1372 = vpack.c.b16 %v1048, %v1044
    %v1373 = vpack.c.b16 %v1053, %v1049
    %v1374 = vpack.c.b16 %v1054, %v1050
    %v1375 = vpack.c.b16 %v1055, %v1051
    %v1376 = vpack.c.b16 %v1056, %v1052
    %v1377 = vpack.c.b16 %v1061, %v1057
    %v1378 = vpack.c.b16 %v1062, %v1058
    %v1379 = vpack.c.b16 %v1063, %v1059
    %v1380 = vpack.c.b16 %v1064, %v1060
    %v1381 = vpack.c.b16 %v1069, %v1065
    %v1382 = vpack.c.b16 %v1070, %v1066
    %v1383 = vpack.c.b16 %v1071, %v1067
    %v1384 = vpack.c.b16 %v1072, %v1068
    %v1385 = vpack.c.b16 %v1077, %v1073
    %v1386 = vpack.c.b16 %v1078, %v1074
    %v1387 = vpack.c.b16 %v1079, %v1075
    %v1388 = vpack.c.b16 %v1080, %v1076
    %v1389 = vpack.c.b16 %v1085, %v1081
    %v1390 = vpack.c.b16 %v1086, %v1082
    %v1391 = vpack.c.b16 %v1087, %v1083
    %v1392 = vpack.c.b16 %v1088, %v1084
    %v1393 = vpack.c.b16 %v1093, %v1089
    %v1394 = vpack.c.b16 %v1094, %v1090
    %v1395 = vpack.c.b16 %v1095, %v1091
    %v1396 = vpack.c.b16 %v1096, %v1092
    %v1397 = vpack.c.b16 %v1101, %v1097
    %v1398 = vpack.c.b16 %v1102, %v1098
    %v1399 = vpack.c.b16 %v1103, %v1099
    %v1400 = vpack.c.b16 %v1104, %v1100
    %v1401 = vpack.c.b16 %v1109, %v1105
    %v1402 = vpack.c.b16 %v1110, %v1106
    %v1403 = vpack.c.b16 %v1111, %v1107
    %v1404 = vpack.c.b16 %v1112, %v1108
    %v1405 = vpack.c.b16 %v1117, %v1113
    %v1406 = vpack.c.b16 %v1118, %v1114
    %v1407 = vpack.c.b16 %v1119, %v1115
    %v1408 = vpack.c.b16 %v1120, %v1116
    %v1409 = vpack.c.b16 %v1125, %v1121
    %v1410 = vpack.c.b16 %v1126, %v1122
    %v1411 = vpack.c.b16 %v1127, %v1123
    %v1412 = vpack.c.b16 %v1128, %v1124
    %v1413 = vpack.c.b16 %v1133, %v1129
    %v1414 = vpack.c.b16 %v1134, %v1130
    %v1415 = vpack.c.b16 %v1135, %v1131
    %v1416 = vpack.c.b16 %v1136, %v1132
    %v1417 = vpack.c.b16 %v1141, %v1137
    %v1418 = vpack.c.b16 %v1142, %v1138
    %v1419 = vpack.c.b16 %v1143, %v1139
    %v1420 = vpack.c.b16 %v1144, %v1140
    %v1421 = vpack.c.b16 %v1149, %v1145
    %v1422 = vpack.c.b16 %v1150, %v1146
    %v1423 = vpack.c.b16 %v1151, %v1147
    %v1424 = vpack.c.b16 %v1152, %v1148
    %v1425 = vpack.c.b16 %v1157, %v1153
    %v1426 = vpack.c.b16 %v1158, %v1154
    %v1427 = vpack.c.b16 %v1159, %v1155
    %v1428 = vpack.c.b16 %v1160, %v1156
    %v1429 = vpack.c.b16 %v1165, %v1161
    %v1430 = vpack.c.b16 %v1166, %v1162
    %v1431 = vpack.c.b16 %v1167, %v1163
    %v1432 = vpack.c.b16 %v1168, %v1164
    %v1433 = vpack.c.b16 %v1173, %v1169
    %v1434 = vpack.c.b16 %v1174, %v1170
    %v1435 = vpack.c.b16 %v1175, %v1171
    %v1436 = vpack.c.b16 %v1176, %v1172
    %v1437 = vpack.c.b16 %v1181, %v1177
    %v1438 = vpack.c.b16 %v1182, %v1178
    %v1439 = vpack.c.b16 %v1183, %v1179
    %v1440 = vpack.c.b16 %v1184, %v1180
    %1697 = vmatprep.subr.bf16.mxu0 %v1214
    %1698 = vmatpush1.bf16.msra.mxu0 %v1213
    %1699 = vmatprep.subr.bf16.mxu0 %v1210
    %1700 = vmatpush1.bf16.msra.mxu0 %v1209
    %1701 = vmatprep.subr.bf16.mxu0 %v1206
    %1702 = vmatpush1.bf16.msra.mxu0 %v1205
    %1703 = vmatprep.subr.bf16.mxu0 %v1202
    %1704 = vmatpush1.bf16.msra.mxu0 %v1201
    %1705 = vmatprep.subr.bf16.mxu0 %v1198
    %1706 = vmatpush1.bf16.msra.mxu0 %v1197
    %1707 = vmatprep.subr.bf16.mxu0 %v1194
    %1708 = vmatpush1.bf16.msra.mxu0 %v1193
    %1709 = vmatprep.subr.bf16.mxu0 %v1190
    %1710 = vmatpush1.bf16.msra.mxu0 %v1189
    %1711 = vmatprep.subr.bf16.mxu0 %v1186
    %1712 = vmatpush1.bf16.msra.mxu0 %v1185
    %1713 = vmatprep.subr.bf16.mxu0 %v1246
    %1714 = vmatpush2.bf16.msra.mxu0 %v1245
    %1715 = vmatprep.subr.bf16.mxu0 %v1242
    %1716 = vmatpush2.bf16.msra.mxu0 %v1241
    %1717 = vmatprep.subr.bf16.mxu0 %v1238
    %1718 = vmatpush2.bf16.msra.mxu0 %v1237
    %1719 = vmatprep.subr.bf16.mxu0 %v1234
    %1720 = vmatpush2.bf16.msra.mxu0 %v1233
    %1721 = vmatprep.subr.bf16.mxu0 %v1230
    %1722 = vmatpush2.bf16.msra.mxu0 %v1229
    %1723 = vmatprep.subr.bf16.mxu0 %v1226
    %1724 = vmatpush2.bf16.msra.mxu0 %v1225
    %1725 = vmatprep.subr.bf16.mxu0 %v1222
    %1726 = vmatpush2.bf16.msra.mxu0 %v1221
    %1727 = vmatprep.subr.bf16.mxu0 %v1218
    %1728 = vmatpush2.bf16.msra.mxu0 %v1217
    %1729 = vmatprep.mubr.bf16.mxu0 %v402
    %1730 = vmatmul.mubr.bf16.gmra.mxu0 %v401
    %v1731 = vpop.f32.mrf.mxu0
    %v1732 = vadd.f32 %v360, %v1731
    %v1733 = vpop.f32.mrf.mxu0
    %v1734 = vadd.f32 %v364, %v1733
    %v1735 = vpop.f32.mrf.mxu0
    %v1736 = vadd.f32 %v360, %v1735
    %v1737 = vpop.f32.mrf.mxu0
    %v1738 = vadd.f32 %v364, %v1737
    %1739 = vdwg.mxu0
    %1740 = vmatprep.subr.bf16.mxu0 %v1278
    %1741 = vmatpush1.bf16.msra.mxu0 %v1277
    %1742 = vmatprep.subr.bf16.mxu0 %v1274
    %1743 = vmatpush1.bf16.msra.mxu0 %v1273
    %1744 = vmatprep.subr.bf16.mxu0 %v1270
    %1745 = vmatpush1.bf16.msra.mxu0 %v1269
    %1746 = vmatprep.subr.bf16.mxu0 %v1266
    %1747 = vmatpush1.bf16.msra.mxu0 %v1265
    %1748 = vmatprep.subr.bf16.mxu0 %v1262
    %1749 = vmatpush1.bf16.msra.mxu0 %v1261
    %1750 = vmatprep.subr.bf16.mxu0 %v1258
    %1751 = vmatpush1.bf16.msra.mxu0 %v1257
    %1752 = vmatprep.subr.bf16.mxu0 %v1254
    %1753 = vmatpush1.bf16.msra.mxu0 %v1253
    %1754 = vmatprep.subr.bf16.mxu0 %v1250
    %1755 = vmatpush1.bf16.msra.mxu0 %v1249
    %1756 = vmatprep.subr.bf16.mxu0 %v1310
    %1757 = vmatpush2.bf16.msra.mxu0 %v1309
    %1758 = vmatprep.subr.bf16.mxu0 %v1306
    %1759 = vmatpush2.bf16.msra.mxu0 %v1305
    %1760 = vmatprep.subr.bf16.mxu0 %v1302
    %1761 = vmatpush2.bf16.msra.mxu0 %v1301
    %1762 = vmatprep.subr.bf16.mxu0 %v1298
    %1763 = vmatpush2.bf16.msra.mxu0 %v1297
    %1764 = vmatprep.subr.bf16.mxu0 %v1294
    %1765 = vmatpush2.bf16.msra.mxu0 %v1293
    %1766 = vmatprep.subr.bf16.mxu0 %v1290
    %1767 = vmatpush2.bf16.msra.mxu0 %v1289
    %1768 = vmatprep.subr.bf16.mxu0 %v1286
    %1769 = vmatpush2.bf16.msra.mxu0 %v1285
    %1770 = vmatprep.subr.bf16.mxu0 %v1282
    %1771 = vmatpush2.bf16.msra.mxu0 %v1281
    %1772 = vmatprep.mubr.bf16.mxu0 %v404
    %1773 = vmatmul.mubr.bf16.gmra.mxu0 %v403
    %v1774 = vpop.f32.mrf.mxu0
    %v1775 = vadd.f32 %v1732, %v1774
    %v1776 = vpop.f32.mrf.mxu0
    %v1777 = vadd.f32 %v1734, %v1776
    %v1778 = vpop.f32.mrf.mxu0
    %v1779 = vadd.f32 %v1736, %v1778
    %v1780 = vpop.f32.mrf.mxu0
    %v1781 = vadd.f32 %v1738, %v1780
    %1782 = vdwg.mxu0
    %1783 = vmatprep.subr.bf16.mxu0 %v1342
    %1784 = vmatpush1.bf16.msra.mxu0 %v1341
    %1785 = vmatprep.subr.bf16.mxu0 %v1338
    %1786 = vmatpush1.bf16.msra.mxu0 %v1337
    %1787 = vmatprep.subr.bf16.mxu0 %v1334
    %1788 = vmatpush1.bf16.msra.mxu0 %v1333
    %1789 = vmatprep.subr.bf16.mxu0 %v1330
    %1790 = vmatpush1.bf16.msra.mxu0 %v1329
    %1791 = vmatprep.subr.bf16.mxu0 %v1326
    %1792 = vmatpush1.bf16.msra.mxu0 %v1325
    %1793 = vmatprep.subr.bf16.mxu0 %v1322
    %1794 = vmatpush1.bf16.msra.mxu0 %v1321
    %1795 = vmatprep.subr.bf16.mxu0 %v1318
    %1796 = vmatpush1.bf16.msra.mxu0 %v1317
    %1797 = vmatprep.subr.bf16.mxu0 %v1314
    %1798 = vmatpush1.bf16.msra.mxu0 %v1313
    %1799 = vmatprep.subr.bf16.mxu0 %v1374
    %1800 = vmatpush2.bf16.msra.mxu0 %v1373
    %1801 = vmatprep.subr.bf16.mxu0 %v1370
    %1802 = vmatpush2.bf16.msra.mxu0 %v1369
    %1803 = vmatprep.subr.bf16.mxu0 %v1366
    %1804 = vmatpush2.bf16.msra.mxu0 %v1365
    %1805 = vmatprep.subr.bf16.mxu0 %v1362
    %1806 = vmatpush2.bf16.msra.mxu0 %v1361
    %1807 = vmatprep.subr.bf16.mxu0 %v1358
    %1808 = vmatpush2.bf16.msra.mxu0 %v1357
    %1809 = vmatprep.subr.bf16.mxu0 %v1354
    %1810 = vmatpush2.bf16.msra.mxu0 %v1353
    %1811 = vmatprep.subr.bf16.mxu0 %v1350
    %1812 = vmatpush2.bf16.msra.mxu0 %v1349
    %1813 = vmatprep.subr.bf16.mxu0 %v1346
    %1814 = vmatpush2.bf16.msra.mxu0 %v1345
    %1815 = vmatprep.mubr.bf16.mxu0 %v406
    %1816 = vmatmul.mubr.bf16.gmra.mxu0 %v405
    %v1817 = vpop.f32.mrf.mxu0
    %v1818 = vadd.f32 %v1775, %v1817
    %v1819 = vpop.f32.mrf.mxu0
    %v1820 = vadd.f32 %v1777, %v1819
    %v1821 = vpop.f32.mrf.mxu0
    %v1822 = vadd.f32 %v1779, %v1821
    %v1823 = vpop.f32.mrf.mxu0
    %v1824 = vadd.f32 %v1781, %v1823
    %1825 = vdwg.mxu0
    %1826 = vmatprep.subr.bf16.mxu0 %v1406
    %1827 = vmatpush1.bf16.msra.mxu0 %v1405
    %1828 = vmatprep.subr.bf16.mxu0 %v1402
    %1829 = vmatpush1.bf16.msra.mxu0 %v1401
    %1830 = vmatprep.subr.bf16.mxu0 %v1398
    %1831 = vmatpush1.bf16.msra.mxu0 %v1397
    %1832 = vmatprep.subr.bf16.mxu0 %v1394
    %1833 = vmatpush1.bf16.msra.mxu0 %v1393
    %1834 = vmatprep.subr.bf16.mxu0 %v1390
    %1835 = vmatpush1.bf16.msra.mxu0 %v1389
    %1836 = vmatprep.subr.bf16.mxu0 %v1386
    %1837 = vmatpush1.bf16.msra.mxu0 %v1385
    %1838 = vmatprep.subr.bf16.mxu0 %v1382
    %1839 = vmatpush1.bf16.msra.mxu0 %v1381
    %1840 = vmatprep.subr.bf16.mxu0 %v1378
    %1841 = vmatpush1.bf16.msra.mxu0 %v1377
    %1842 = vmatprep.subr.bf16.mxu0 %v1438
    %1843 = vmatpush2.bf16.msra.mxu0 %v1437
    %1844 = vmatprep.subr.bf16.mxu0 %v1434
    %1845 = vmatpush2.bf16.msra.mxu0 %v1433
    %1846 = vmatprep.subr.bf16.mxu0 %v1430
    %1847 = vmatpush2.bf16.msra.mxu0 %v1429
    %1848 = vmatprep.subr.bf16.mxu0 %v1426
    %1849 = vmatpush2.bf16.msra.mxu0 %v1425
    %1850 = vmatprep.subr.bf16.mxu0 %v1422
    %1851 = vmatpush2.bf16.msra.mxu0 %v1421
    %1852 = vmatprep.subr.bf16.mxu0 %v1418
    %1853 = vmatpush2.bf16.msra.mxu0 %v1417
    %1854 = vmatprep.subr.bf16.mxu0 %v1414
    %1855 = vmatpush2.bf16.msra.mxu0 %v1413
    %1856 = vmatprep.subr.bf16.mxu0 %v1410
    %1857 = vmatpush2.bf16.msra.mxu0 %v1409
    %1858 = vmatprep.mubr.bf16.mxu0 %v408
    %1859 = vmatmul.mubr.bf16.gmra.mxu0 %v407
    %v1860 = vpop.f32.mrf.mxu0
    %v1861 = vadd.f32 %v1818, %v1860
    %v1862 = vpop.f32.mrf.mxu0
    %v1863 = vadd.f32 %v1820, %v1862
    %v1864 = vpop.f32.mrf.mxu0
    %v1865 = vadd.f32 %v1822, %v1864
    %v1866 = vpop.f32.mrf.mxu0
    %v1867 = vadd.f32 %v1824, %v1866
    %1868 = vdwg.mxu0
    %1869 = vmatprep.subr.bf16.mxu0 %v1216
    %1870 = vmatpush1.bf16.msra.mxu0 %v1215
    %1871 = vmatprep.subr.bf16.mxu0 %v1212
    %1872 = vmatpush1.bf16.msra.mxu0 %v1211
    %1873 = vmatprep.subr.bf16.mxu0 %v1208
    %1874 = vmatpush1.bf16.msra.mxu0 %v1207
    %1875 = vmatprep.subr.bf16.mxu0 %v1204
    %1876 = vmatpush1.bf16.msra.mxu0 %v1203
    %1877 = vmatprep.subr.bf16.mxu0 %v1200
    %1878 = vmatpush1.bf16.msra.mxu0 %v1199
    %1879 = vmatprep.subr.bf16.mxu0 %v1196
    %1880 = vmatpush1.bf16.msra.mxu0 %v1195
    %1881 = vmatprep.subr.bf16.mxu0 %v1192
    %1882 = vmatpush1.bf16.msra.mxu0 %v1191
    %1883 = vmatprep.subr.bf16.mxu0 %v1188
    %1884 = vmatpush1.bf16.msra.mxu0 %v1187
    %1885 = vmatprep.subr.bf16.mxu0 %v1248
    %1886 = vmatpush2.bf16.msra.mxu0 %v1247
    %1887 = vmatprep.subr.bf16.mxu0 %v1244
    %1888 = vmatpush2.bf16.msra.mxu0 %v1243
    %1889 = vmatprep.subr.bf16.mxu0 %v1240
    %1890 = vmatpush2.bf16.msra.mxu0 %v1239
    %1891 = vmatprep.subr.bf16.mxu0 %v1236
    %1892 = vmatpush2.bf16.msra.mxu0 %v1235
    %1893 = vmatprep.subr.bf16.mxu0 %v1232
    %1894 = vmatpush2.bf16.msra.mxu0 %v1231
    %1895 = vmatprep.subr.bf16.mxu0 %v1228
    %1896 = vmatpush2.bf16.msra.mxu0 %v1227
    %1897 = vmatprep.subr.bf16.mxu0 %v1224
    %1898 = vmatpush2.bf16.msra.mxu0 %v1223
    %1899 = vmatprep.subr.bf16.mxu0 %v1220
    %1900 = vmatpush2.bf16.msra.mxu0 %v1219
    %1901 = vmatprep.mubr.bf16.mxu0 %v402
    %1902 = vmatmul.mubr.bf16.gmra.mxu0 %v401
    %v1903 = vpop.f32.mrf.mxu0
    %v1904 = vadd.f32 %v368, %v1903
    %v1905 = vpop.f32.mrf.mxu0
    %v1906 = vadd.f32 %v372, %v1905
    %v1907 = vpop.f32.mrf.mxu0
    %v1908 = vadd.f32 %v368, %v1907
    %v1909 = vpop.f32.mrf.mxu0
    %v1910 = vadd.f32 %v372, %v1909
    %1911 = vdwg.mxu0
    %1912 = vmatprep.subr.bf16.mxu0 %v1280
    %1913 = vmatpush1.bf16.msra.mxu0 %v1279
    %1914 = vmatprep.subr.bf16.mxu0 %v1276
    %1915 = vmatpush1.bf16.msra.mxu0 %v1275
    %1916 = vmatprep.subr.bf16.mxu0 %v1272
    %1917 = vmatpush1.bf16.msra.mxu0 %v1271
    %1918 = vmatprep.subr.bf16.mxu0 %v1268
    %1919 = vmatpush1.bf16.msra.mxu0 %v1267
    %1920 = vmatprep.subr.bf16.mxu0 %v1264
    %1921 = vmatpush1.bf16.msra.mxu0 %v1263
    %1922 = vmatprep.subr.bf16.mxu0 %v1260
    %1923 = vmatpush1.bf16.msra.mxu0 %v1259
    %1924 = vmatprep.subr.bf16.mxu0 %v1256
    %1925 = vmatpush1.bf16.msra.mxu0 %v1255
    %1926 = vmatprep.subr.bf16.mxu0 %v1252
    %1927 = vmatpush1.bf16.msra.mxu0 %v1251
    %1928 = vmatprep.subr.bf16.mxu0 %v1312
    %1929 = vmatpush2.bf16.msra.mxu0 %v1311
    %1930 = vmatprep.subr.bf16.mxu0 %v1308
    %1931 = vmatpush2.bf16.msra.mxu0 %v1307
    %1932 = vmatprep.subr.bf16.mxu0 %v1304
    %1933 = vmatpush2.bf16.msra.mxu0 %v1303
    %1934 = vmatprep.subr.bf16.mxu0 %v1300
    %1935 = vmatpush2.bf16.msra.mxu0 %v1299
    %1936 = vmatprep.subr.bf16.mxu0 %v1296
    %1937 = vmatpush2.bf16.msra.mxu0 %v1295
    %1938 = vmatprep.subr.bf16.mxu0 %v1292
    %1939 = vmatpush2.bf16.msra.mxu0 %v1291
    %1940 = vmatprep.subr.bf16.mxu0 %v1288
    %1941 = vmatpush2.bf16.msra.mxu0 %v1287
    %1942 = vmatprep.subr.bf16.mxu0 %v1284
    %1943 = vmatpush2.bf16.msra.mxu0 %v1283
    %1944 = vmatprep.mubr.bf16.mxu0 %v404
    %1945 = vmatmul.mubr.bf16.gmra.mxu0 %v403
    %v1946 = vpop.f32.mrf.mxu0
    %v1947 = vadd.f32 %v1904, %v1946
    %v1948 = vpop.f32.mrf.mxu0
    %v1949 = vadd.f32 %v1906, %v1948
    %v1950 = vpop.f32.mrf.mxu0
    %v1951 = vadd.f32 %v1908, %v1950
    %v1952 = vpop.f32.mrf.mxu0
    %v1953 = vadd.f32 %v1910, %v1952
    %1954 = vdwg.mxu0
    %1955 = vmatprep.subr.bf16.mxu0 %v1344
    %1956 = vmatpush1.bf16.msra.mxu0 %v1343
    %1957 = vmatprep.subr.bf16.mxu0 %v1340
    %1958 = vmatpush1.bf16.msra.mxu0 %v1339
    %1959 = vmatprep.subr.bf16.mxu0 %v1336
    %1960 = vmatpush1.bf16.msra.mxu0 %v1335
    %1961 = vmatprep.subr.bf16.mxu0 %v1332
    %1962 = vmatpush1.bf16.msra.mxu0 %v1331
    %1963 = vmatprep.subr.bf16.mxu0 %v1328
    %1964 = vmatpush1.bf16.msra.mxu0 %v1327
    %1965 = vmatprep.subr.bf16.mxu0 %v1324
    %1966 = vmatpush1.bf16.msra.mxu0 %v1323
    %1967 = vmatprep.subr.bf16.mxu0 %v1320
    %1968 = vmatpush1.bf16.msra.mxu0 %v1319
    %1969 = vmatprep.subr.bf16.mxu0 %v1316
    %1970 = vmatpush1.bf16.msra.mxu0 %v1315
    %1971 = vmatprep.subr.bf16.mxu0 %v1376
    %1972 = vmatpush2.bf16.msra.mxu0 %v1375
    %1973 = vmatprep.subr.bf16.mxu0 %v1372
    %1974 = vmatpush2.bf16.msra.mxu0 %v1371
    %1975 = vmatprep.subr.bf16.mxu0 %v1368
    %1976 = vmatpush2.bf16.msra.mxu0 %v1367
    %1977 = vmatprep.subr.bf16.mxu0 %v1364
    %1978 = vmatpush2.bf16.msra.mxu0 %v1363
    %1979 = vmatprep.subr.bf16.mxu0 %v1360
    %1980 = vmatpush2.bf16.msra.mxu0 %v1359
    %1981 = vmatprep.subr.bf16.mxu0 %v1356
    %1982 = vmatpush2.bf16.msra.mxu0 %v1355
    %1983 = vmatprep.subr.bf16.mxu0 %v1352
    %1984 = vmatpush2.bf16.msra.mxu0 %v1351
    %1985 = vmatprep.subr.bf16.mxu0 %v1348
    %1986 = vmatpush2.bf16.msra.mxu0 %v1347
    %1987 = vmatprep.mubr.bf16.mxu0 %v406
    %1988 = vmatmul.mubr.bf16.gmra.mxu0 %v405
    %v1989 = vpop.f32.mrf.mxu0
    %v1990 = vadd.f32 %v1947, %v1989
    %v1991 = vpop.f32.mrf.mxu0
    %v1992 = vadd.f32 %v1949, %v1991
    %v1993 = vpop.f32.mrf.mxu0
    %v1994 = vadd.f32 %v1951, %v1993
    %v1995 = vpop.f32.mrf.mxu0
    %v1996 = vadd.f32 %v1953, %v1995
    %1997 = vdwg.mxu0
    %1998 = vmatprep.subr.bf16.mxu0 %v1408
    %1999 = vmatpush1.bf16.msra.mxu0 %v1407
    %2000 = vmatprep.subr.bf16.mxu0 %v1404
    %2001 = vmatpush1.bf16.msra.mxu0 %v1403
    %2002 = vmatprep.subr.bf16.mxu0 %v1400
    %2003 = vmatpush1.bf16.msra.mxu0 %v1399
    %2004 = vmatprep.subr.bf16.mxu0 %v1396
    %2005 = vmatpush1.bf16.msra.mxu0 %v1395
    %2006 = vmatprep.subr.bf16.mxu0 %v1392
    %2007 = vmatpush1.bf16.msra.mxu0 %v1391
    %2008 = vmatprep.subr.bf16.mxu0 %v1388
    %2009 = vmatpush1.bf16.msra.mxu0 %v1387
    %2010 = vmatprep.subr.bf16.mxu0 %v1384
    %2011 = vmatpush1.bf16.msra.mxu0 %v1383
    %2012 = vmatprep.subr.bf16.mxu0 %v1380
    %2013 = vmatpush1.bf16.msra.mxu0 %v1379
    %2014 = vmatprep.subr.bf16.mxu0 %v1440
    %2015 = vmatpush2.bf16.msra.mxu0 %v1439
    %2016 = vmatprep.subr.bf16.mxu0 %v1436
    %2017 = vmatpush2.bf16.msra.mxu0 %v1435
    %2018 = vmatprep.subr.bf16.mxu0 %v1432
    %2019 = vmatpush2.bf16.msra.mxu0 %v1431
    %2020 = vmatprep.subr.bf16.mxu0 %v1428
    %2021 = vmatpush2.bf16.msra.mxu0 %v1427
    %2022 = vmatprep.subr.bf16.mxu0 %v1424
    %2023 = vmatpush2.bf16.msra.mxu0 %v1423
    %2024 = vmatprep.subr.bf16.mxu0 %v1420
    %2025 = vmatpush2.bf16.msra.mxu0 %v1419
    %2026 = vmatprep.subr.bf16.mxu0 %v1416
    %2027 = vmatpush2.bf16.msra.mxu0 %v1415
    %2028 = vmatprep.subr.bf16.mxu0 %v1412
    %2029 = vmatpush2.bf16.msra.mxu0 %v1411
    %2030 = vmatprep.mubr.bf16.mxu0 %v408
    %2031 = vmatmul.mubr.bf16.gmra.mxu0 %v407
    %v2032 = vpop.f32.mrf.mxu0
    %v2033 = vadd.f32 %v1990, %v2032
    %v2034 = vpop.f32.mrf.mxu0
    %v2035 = vadd.f32 %v1992, %v2034
    %v2036 = vpop.f32.mrf.mxu0
    %v2037 = vadd.f32 %v1994, %v2036
    %v2038 = vpop.f32.mrf.mxu0
    %v2039 = vadd.f32 %v1996, %v2038
    %2040 = vdwg.mxu0
    %v2041 = vmax.f32 %v1861, 0.0
    %v2042 = vmax.f32 %v1863, 0.0
    %v2043 = vmax.f32 %v2033, 0.0
    %v2044 = vmax.f32 %v2035, 0.0
    %v2045 = vmax.f32 %v1865, 0.0
    %v2046 = vmax.f32 %v1867, 0.0
    %v2047 = vmax.f32 %v2037, 0.0
    %v2048 = vmax.f32 %v2039, 0.0
    %v2049 = vpack.c.bf16 %v2045, %v2041
    %v2050 = vpack.c.bf16 %v2046, %v2042
    %v2051 = vpack.c.bf16 %v2047, %v2043
    %v2052 = vpack.c.bf16 %v2048, %v2044
    %v2053 = vld [vmem:[#allocation7] sm:$0xff]
    %v2054 = vld [vmem:[#allocation7 + $0x8] sm:$0xff]
    %v2055 = vld [vmem:[#allocation7 + $0x10] sm:$0xff]
    %v2056 = vld [vmem:[#allocation7 + $0x18] sm:$0xff]
    %v2057 = vld [vmem:[#allocation7 + $0x20] sm:$0xff]
    %v2058 = vld [vmem:[#allocation7 + $0x28] sm:$0xff]
    %v2059 = vld [vmem:[#allocation7 + $0x30] sm:$0xff]
    %v2060 = vld [vmem:[#allocation7 + $0x38] sm:$0xff]
    %v2061 = vld [vmem:[#allocation7 + $0x40] sm:$0xff]
    %v2062 = vld [vmem:[#allocation7 + $0x48] sm:$0xff]
    %v2063 = vld [vmem:[#allocation7 + $0x50] sm:$0xff]
    %v2064 = vld [vmem:[#allocation7 + $0x58] sm:$0xff]
    %v2065 = vld [vmem:[#allocation7 + $0x60] sm:$0xff]
    %v2066 = vld [vmem:[#allocation7 + $0x68] sm:$0xff]
    %v2067 = vld [vmem:[#allocation7 + $0x70] sm:$0xff]
    %v2068 = vld [vmem:[#allocation7 + $0x78] sm:$0xff]
    %v2069 = vld [vmem:[#allocation7 + $0x80] sm:$0xff]
    %v2070 = vld [vmem:[#allocation7 + $0x88] sm:$0xff]
    %v2071 = vld [vmem:[#allocation7 + $0x90] sm:$0xff]
    %v2072 = vld [vmem:[#allocation7 + $0x98] sm:$0xff]
    %v2073 = vld [vmem:[#allocation7 + $0xa0] sm:$0xff]
    %v2074 = vld [vmem:[#allocation7 + $0xa8] sm:$0xff]
    %v2075 = vld [vmem:[#allocation7 + $0xb0] sm:$0xff]
    %v2076 = vld [vmem:[#allocation7 + $0xb8] sm:$0xff]
    %v2077 = vld [vmem:[#allocation7 + $0xc0] sm:$0xff]
    %v2078 = vld [vmem:[#allocation7 + $0xc8] sm:$0xff]
    %v2079 = vld [vmem:[#allocation7 + $0xd0] sm:$0xff]
    %v2080 = vld [vmem:[#allocation7 + $0xd8] sm:$0xff]
    %v2081 = vld [vmem:[#allocation7 + $0xe0] sm:$0xff]
    %v2082 = vld [vmem:[#allocation7 + $0xe8] sm:$0xff]
    %v2083 = vld [vmem:[#allocation7 + $0xf0] sm:$0xff]
    %v2084 = vld [vmem:[#allocation7 + $0xf8] sm:$0xff]
    %v2085 = vld [vmem:[#allocation7 + $0x100] sm:$0xff]
    %v2086 = vld [vmem:[#allocation7 + $0x108] sm:$0xff]
    %v2087 = vld [vmem:[#allocation7 + $0x110] sm:$0xff]
    %v2088 = vld [vmem:[#allocation7 + $0x118] sm:$0xff]
    %v2089 = vld [vmem:[#allocation7 + $0x120] sm:$0xff]
    %v2090 = vld [vmem:[#allocation7 + $0x128] sm:$0xff]
    %v2091 = vld [vmem:[#allocation7 + $0x130] sm:$0xff]
    %v2092 = vld [vmem:[#allocation7 + $0x138] sm:$0xff]
    %v2093 = vld [vmem:[#allocation7 + $0x140] sm:$0xff]
    %v2094 = vld [vmem:[#allocation7 + $0x148] sm:$0xff]
    %v2095 = vld [vmem:[#allocation7 + $0x150] sm:$0xff]
    %v2096 = vld [vmem:[#allocation7 + $0x158] sm:$0xff]
    %v2097 = vld [vmem:[#allocation7 + $0x160] sm:$0xff]
    %v2098 = vld [vmem:[#allocation7 + $0x168] sm:$0xff]
    %v2099 = vld [vmem:[#allocation7 + $0x170] sm:$0xff]
    %v2100 = vld [vmem:[#allocation7 + $0x178] sm:$0xff]
    %v2101 = vld [vmem:[#allocation7 + $0x180] sm:$0xff]
    %v2102 = vld [vmem:[#allocation7 + $0x188] sm:$0xff]
    %v2103 = vld [vmem:[#allocation7 + $0x190] sm:$0xff]
    %v2104 = vld [vmem:[#allocation7 + $0x198] sm:$0xff]
    %v2105 = vld [vmem:[#allocation7 + $0x1a0] sm:$0xff]
    %v2106 = vld [vmem:[#allocation7 + $0x1a8] sm:$0xff]
    %v2107 = vld [vmem:[#allocation7 + $0x1b0] sm:$0xff]
    %v2108 = vld [vmem:[#allocation7 + $0x1b8] sm:$0xff]
    %v2109 = vld [vmem:[#allocation7 + $0x1c0] sm:$0xff]
    %v2110 = vld [vmem:[#allocation7 + $0x1c8] sm:$0xff]
    %v2111 = vld [vmem:[#allocation7 + $0x1d0] sm:$0xff]
    %v2112 = vld [vmem:[#allocation7 + $0x1d8] sm:$0xff]
    %v2113 = vld [vmem:[#allocation7 + $0x1e0] sm:$0xff]
    %v2114 = vld [vmem:[#allocation7 + $0x1e8] sm:$0xff]
    %v2115 = vld [vmem:[#allocation7 + $0x1f0] sm:$0xff]
    %v2116 = vld [vmem:[#allocation7 + $0x1f8] sm:$0xff]
    %v2118 = vlaneseq
    %v2119 = vshrl.u32 %v2118, 7
    %v2120 = vsub.s32 0, %v2119
    %v2121 = vrot.slane %v89, %v2120
    %v2122 = vlaneseq
    %v2123 = vshrl.u32 %v2122, 7
    %v2124 = vsub.s32 1, %v2123
    %v2125 = vrot.slane %v89, %v2124
    %v2192 = vunpack.c.l.b16 %v2053
    %v2193 = vunpack.c.h.b16 %v2053
    %v2194 = vunpack.c.l.b16 %v2054
    %v2195 = vunpack.c.h.b16 %v2054
    %v2196 = vunpack.c.l.b16 %v2055
    %v2197 = vunpack.c.h.b16 %v2055
    %v2198 = vunpack.c.l.b16 %v2056
    %v2199 = vunpack.c.h.b16 %v2056
    %v2200 = vunpack.c.l.b16 %v2057
    %v2201 = vunpack.c.h.b16 %v2057
    %v2202 = vunpack.c.l.b16 %v2058
    %v2203 = vunpack.c.h.b16 %v2058
    %v2204 = vunpack.c.l.b16 %v2059
    %v2205 = vunpack.c.h.b16 %v2059
    %v2206 = vunpack.c.l.b16 %v2060
    %v2207 = vunpack.c.h.b16 %v2060
    %v2208 = vunpack.c.l.b16 %v2061
    %v2209 = vunpack.c.h.b16 %v2061
    %v2210 = vunpack.c.l.b16 %v2062
    %v2211 = vunpack.c.h.b16 %v2062
    %v2212 = vunpack.c.l.b16 %v2063
    %v2213 = vunpack.c.h.b16 %v2063
    %v2214 = vunpack.c.l.b16 %v2064
    %v2215 = vunpack.c.h.b16 %v2064
    %v2216 = vunpack.c.l.b16 %v2065
    %v2217 = vunpack.c.h.b16 %v2065
    %v2218 = vunpack.c.l.b16 %v2066
    %v2219 = vunpack.c.h.b16 %v2066
    %v2220 = vunpack.c.l.b16 %v2067
    %v2221 = vunpack.c.h.b16 %v2067
    %v2222 = vunpack.c.l.b16 %v2068
    %v2223 = vunpack.c.h.b16 %v2068
    %v2224 = vunpack.c.l.b16 %v2069
    %v2225 = vunpack.c.h.b16 %v2069
    %v2226 = vunpack.c.l.b16 %v2070
    %v2227 = vunpack.c.h.b16 %v2070
    %v2228 = vunpack.c.l.b16 %v2071
    %v2229 = vunpack.c.h.b16 %v2071
    %v2230 = vunpack.c.l.b16 %v2072
    %v2231 = vunpack.c.h.b16 %v2072
    %v2232 = vunpack.c.l.b16 %v2073
    %v2233 = vunpack.c.h.b16 %v2073
    %v2234 = vunpack.c.l.b16 %v2074
    %v2235 = vunpack.c.h.b16 %v2074
    %v2236 = vunpack.c.l.b16 %v2075
    %v2237 = vunpack.c.h.b16 %v2075
    %v2238 = vunpack.c.l.b16 %v2076
    %v2239 = vunpack.c.h.b16 %v2076
    %v2240 = vunpack.c.l.b16 %v2077
    %v2241 = vunpack.c.h.b16 %v2077
    %v2242 = vunpack.c.l.b16 %v2078
    %v2243 = vunpack.c.h.b16 %v2078
    %v2244 = vunpack.c.l.b16 %v2079
    %v2245 = vunpack.c.h.b16 %v2079
    %v2246 = vunpack.c.l.b16 %v2080
    %v2247 = vunpack.c.h.b16 %v2080
    %v2248 = vunpack.c.l.b16 %v2081
    %v2249 = vunpack.c.h.b16 %v2081
    %v2250 = vunpack.c.l.b16 %v2082
    %v2251 = vunpack.c.h.b16 %v2082
    %v2252 = vunpack.c.l.b16 %v2083
    %v2253 = vunpack.c.h.b16 %v2083
    %v2254 = vunpack.c.l.b16 %v2084
    %v2255 = vunpack.c.h.b16 %v2084
    %v2256 = vunpack.c.l.b16 %v2085
    %v2257 = vunpack.c.h.b16 %v2085
    %v2258 = vunpack.c.l.b16 %v2086
    %v2259 = vunpack.c.h.b16 %v2086
    %v2260 = vunpack.c.l.b16 %v2087
    %v2261 = vunpack.c.h.b16 %v2087
    %v2262 = vunpack.c.l.b16 %v2088
    %v2263 = vunpack.c.h.b16 %v2088
    %v2264 = vunpack.c.l.b16 %v2089
    %v2265 = vunpack.c.h.b16 %v2089
    %v2266 = vunpack.c.l.b16 %v2090
    %v2267 = vunpack.c.h.b16 %v2090
    %v2268 = vunpack.c.l.b16 %v2091
    %v2269 = vunpack.c.h.b16 %v2091
    %v2270 = vunpack.c.l.b16 %v2092
    %v2271 = vunpack.c.h.b16 %v2092
    %v2272 = vunpack.c.l.b16 %v2093
    %v2273 = vunpack.c.h.b16 %v2093
    %v2274 = vunpack.c.l.b16 %v2094
    %v2275 = vunpack.c.h.b16 %v2094
    %v2276 = vunpack.c.l.b16 %v2095
    %v2277 = vunpack.c.h.b16 %v2095
    %v2278 = vunpack.c.l.b16 %v2096
    %v2279 = vunpack.c.h.b16 %v2096
    %v2280 = vunpack.c.l.b16 %v2097
    %v2281 = vunpack.c.h.b16 %v2097
    %v2282 = vunpack.c.l.b16 %v2098
    %v2283 = vunpack.c.h.b16 %v2098
    %v2284 = vunpack.c.l.b16 %v2099
    %v2285 = vunpack.c.h.b16 %v2099
    %v2286 = vunpack.c.l.b16 %v2100
    %v2287 = vunpack.c.h.b16 %v2100
    %v2288 = vunpack.c.l.b16 %v2101
    %v2289 = vunpack.c.h.b16 %v2101
    %v2290 = vunpack.c.l.b16 %v2102
    %v2291 = vunpack.c.h.b16 %v2102
    %v2292 = vunpack.c.l.b16 %v2103
    %v2293 = vunpack.c.h.b16 %v2103
    %v2294 = vunpack.c.l.b16 %v2104
    %v2295 = vunpack.c.h.b16 %v2104
    %v2296 = vunpack.c.l.b16 %v2105
    %v2297 = vunpack.c.h.b16 %v2105
    %v2298 = vunpack.c.l.b16 %v2106
    %v2299 = vunpack.c.h.b16 %v2106
    %v2300 = vunpack.c.l.b16 %v2107
    %v2301 = vunpack.c.h.b16 %v2107
    %v2302 = vunpack.c.l.b16 %v2108
    %v2303 = vunpack.c.h.b16 %v2108
    %v2304 = vunpack.c.l.b16 %v2109
    %v2305 = vunpack.c.h.b16 %v2109
    %v2306 = vunpack.c.l.b16 %v2110
    %v2307 = vunpack.c.h.b16 %v2110
    %v2308 = vunpack.c.l.b16 %v2111
    %v2309 = vunpack.c.h.b16 %v2111
    %v2310 = vunpack.c.l.b16 %v2112
    %v2311 = vunpack.c.h.b16 %v2112
    %v2312 = vunpack.c.l.b16 %v2113
    %v2313 = vunpack.c.h.b16 %v2113
    %v2314 = vunpack.c.l.b16 %v2114
    %v2315 = vunpack.c.h.b16 %v2114
    %v2316 = vunpack.c.l.b16 %v2115
    %v2317 = vunpack.c.h.b16 %v2115
    %v2318 = vunpack.c.l.b16 %v2116
    %v2319 = vunpack.c.h.b16 %v2116
    %v2320 = vpack.c.b16 %v2194, %v2192
    %v2321 = vpack.c.b16 %v2195, %v2193
    %v2322 = vpack.c.b16 %v2198, %v2196
    %v2323 = vpack.c.b16 %v2199, %v2197
    %v2324 = vpack.c.b16 %v2202, %v2200
    %v2325 = vpack.c.b16 %v2203, %v2201
    %v2326 = vpack.c.b16 %v2206, %v2204
    %v2327 = vpack.c.b16 %v2207, %v2205
    %v2328 = vpack.c.b16 %v2210, %v2208
    %v2329 = vpack.c.b16 %v2211, %v2209
    %v2330 = vpack.c.b16 %v2214, %v2212
    %v2331 = vpack.c.b16 %v2215, %v2213
    %v2332 = vpack.c.b16 %v2218, %v2216
    %v2333 = vpack.c.b16 %v2219, %v2217
    %v2334 = vpack.c.b16 %v2222, %v2220
    %v2335 = vpack.c.b16 %v2223, %v2221
    %v2336 = vpack.c.b16 %v2226, %v2224
    %v2337 = vpack.c.b16 %v2227, %v2225
    %v2338 = vpack.c.b16 %v2230, %v2228
    %v2339 = vpack.c.b16 %v2231, %v2229
    %v2340 = vpack.c.b16 %v2234, %v2232
    %v2341 = vpack.c.b16 %v2235, %v2233
    %v2342 = vpack.c.b16 %v2238, %v2236
    %v2343 = vpack.c.b16 %v2239, %v2237
    %v2344 = vpack.c.b16 %v2242, %v2240
    %v2345 = vpack.c.b16 %v2243, %v2241
    %v2346 = vpack.c.b16 %v2246, %v2244
    %v2347 = vpack.c.b16 %v2247, %v2245
    %v2348 = vpack.c.b16 %v2250, %v2248
    %v2349 = vpack.c.b16 %v2251, %v2249
    %v2350 = vpack.c.b16 %v2254, %v2252
    %v2351 = vpack.c.b16 %v2255, %v2253
    %v2352 = vpack.c.b16 %v2258, %v2256
    %v2353 = vpack.c.b16 %v2259, %v2257
    %v2354 = vpack.c.b16 %v2262, %v2260
    %v2355 = vpack.c.b16 %v2263, %v2261
    %v2356 = vpack.c.b16 %v2266, %v2264
    %v2357 = vpack.c.b16 %v2267, %v2265
    %v2358 = vpack.c.b16 %v2270, %v2268
    %v2359 = vpack.c.b16 %v2271, %v2269
    %v2360 = vpack.c.b16 %v2274, %v2272
    %v2361 = vpack.c.b16 %v2275, %v2273
    %v2362 = vpack.c.b16 %v2278, %v2276
    %v2363 = vpack.c.b16 %v2279, %v2277
    %v2364 = vpack.c.b16 %v2282, %v2280
    %v2365 = vpack.c.b16 %v2283, %v2281
    %v2366 = vpack.c.b16 %v2286, %v2284
    %v2367 = vpack.c.b16 %v2287, %v2285
    %v2368 = vpack.c.b16 %v2290, %v2288
    %v2369 = vpack.c.b16 %v2291, %v2289
    %v2370 = vpack.c.b16 %v2294, %v2292
    %v2371 = vpack.c.b16 %v2295, %v2293
    %v2372 = vpack.c.b16 %v2298, %v2296
    %v2373 = vpack.c.b16 %v2299, %v2297
    %v2374 = vpack.c.b16 %v2302, %v2300
    %v2375 = vpack.c.b16 %v2303, %v2301
    %v2376 = vpack.c.b16 %v2306, %v2304
    %v2377 = vpack.c.b16 %v2307, %v2305
    %v2378 = vpack.c.b16 %v2310, %v2308
    %v2379 = vpack.c.b16 %v2311, %v2309
    %v2380 = vpack.c.b16 %v2314, %v2312
    %v2381 = vpack.c.b16 %v2315, %v2313
    %v2382 = vpack.c.b16 %v2318, %v2316
    %v2383 = vpack.c.b16 %v2319, %v2317
    %2448 = vmatprep.subr.bf16.mxu0 %v2335
    %2449 = vmatpush1.bf16.msra.mxu0 %v2334
    %2450 = vmatprep.subr.bf16.mxu0 %v2333
    %2451 = vmatpush1.bf16.msra.mxu0 %v2332
    %2452 = vmatprep.subr.bf16.mxu0 %v2331
    %2453 = vmatpush1.bf16.msra.mxu0 %v2330
    %2454 = vmatprep.subr.bf16.mxu0 %v2329
    %2455 = vmatpush1.bf16.msra.mxu0 %v2328
    %2456 = vmatprep.subr.bf16.mxu0 %v2327
    %2457 = vmatpush1.bf16.msra.mxu0 %v2326
    %2458 = vmatprep.subr.bf16.mxu0 %v2325
    %2459 = vmatpush1.bf16.msra.mxu0 %v2324
    %2460 = vmatprep.subr.bf16.mxu0 %v2323
    %2461 = vmatpush1.bf16.msra.mxu0 %v2322
    %2462 = vmatprep.subr.bf16.mxu0 %v2321
    %2463 = vmatpush1.bf16.msra.mxu0 %v2320
    %2464 = vmatprep.subr.bf16.mxu0 %v2351
    %2465 = vmatpush2.bf16.msra.mxu0 %v2350
    %2466 = vmatprep.subr.bf16.mxu0 %v2349
    %2467 = vmatpush2.bf16.msra.mxu0 %v2348
    %2468 = vmatprep.subr.bf16.mxu0 %v2347
    %2469 = vmatpush2.bf16.msra.mxu0 %v2346
    %2470 = vmatprep.subr.bf16.mxu0 %v2345
    %2471 = vmatpush2.bf16.msra.mxu0 %v2344
    %2472 = vmatprep.subr.bf16.mxu0 %v2343
    %2473 = vmatpush2.bf16.msra.mxu0 %v2342
    %2474 = vmatprep.subr.bf16.mxu0 %v2341
    %2475 = vmatpush2.bf16.msra.mxu0 %v2340
    %2476 = vmatprep.subr.bf16.mxu0 %v2339
    %2477 = vmatpush2.bf16.msra.mxu0 %v2338
    %2478 = vmatprep.subr.bf16.mxu0 %v2337
    %2479 = vmatpush2.bf16.msra.mxu0 %v2336
    %2480 = vmatprep.mubr.bf16.mxu0 %v2050
    %2481 = vmatmul.mubr.bf16.gmra.mxu0 %v2049
    %v2482 = vpop.f32.mrf.mxu0
    %v2483 = vadd.f32 %v2121, %v2482
    %v2484 = vpop.f32.mrf.mxu0
    %v2485 = vadd.f32 %v2125, %v2484
    %v2486 = vpop.f32.mrf.mxu0
    %v2487 = vadd.f32 %v2121, %v2486
    %v2488 = vpop.f32.mrf.mxu0
    %v2489 = vadd.f32 %v2125, %v2488
    %2490 = vdwg.mxu0
    %2491 = vmatprep.subr.bf16.mxu0 %v2367
    %2492 = vmatpush1.bf16.msra.mxu0 %v2366
    %2493 = vmatprep.subr.bf16.mxu0 %v2365
    %2494 = vmatpush1.bf16.msra.mxu0 %v2364
    %2495 = vmatprep.subr.bf16.mxu0 %v2363
    %2496 = vmatpush1.bf16.msra.mxu0 %v2362
    %2497 = vmatprep.subr.bf16.mxu0 %v2361
    %2498 = vmatpush1.bf16.msra.mxu0 %v2360
    %2499 = vmatprep.subr.bf16.mxu0 %v2359
    %2500 = vmatpush1.bf16.msra.mxu0 %v2358
    %2501 = vmatprep.subr.bf16.mxu0 %v2357
    %2502 = vmatpush1.bf16.msra.mxu0 %v2356
    %2503 = vmatprep.subr.bf16.mxu0 %v2355
    %2504 = vmatpush1.bf16.msra.mxu0 %v2354
    %2505 = vmatprep.subr.bf16.mxu0 %v2353
    %2506 = vmatpush1.bf16.msra.mxu0 %v2352
    %2507 = vmatprep.subr.bf16.mxu0 %v2383
    %2508 = vmatpush2.bf16.msra.mxu0 %v2382
    %2509 = vmatprep.subr.bf16.mxu0 %v2381
    %2510 = vmatpush2.bf16.msra.mxu0 %v2380
    %2511 = vmatprep.subr.bf16.mxu0 %v2379
    %2512 = vmatpush2.bf16.msra.mxu0 %v2378
    %2513 = vmatprep.subr.bf16.mxu0 %v2377
    %2514 = vmatpush2.bf16.msra.mxu0 %v2376
    %2515 = vmatprep.subr.bf16.mxu0 %v2375
    %2516 = vmatpush2.bf16.msra.mxu0 %v2374
    %2517 = vmatprep.subr.bf16.mxu0 %v2373
    %2518 = vmatpush2.bf16.msra.mxu0 %v2372
    %2519 = vmatprep.subr.bf16.mxu0 %v2371
    %2520 = vmatpush2.bf16.msra.mxu0 %v2370
    %2521 = vmatprep.subr.bf16.mxu0 %v2369
    %2522 = vmatpush2.bf16.msra.mxu0 %v2368
    %2523 = vmatprep.mubr.bf16.mxu0 %v2052
    %2524 = vmatmul.mubr.bf16.gmra.mxu0 %v2051
    %v2525 = vpop.f32.mrf.mxu0
    %v2526 = vadd.f32 %v2483, %v2525
    %v2527 = vpop.f32.mrf.mxu0
    %v2528 = vadd.f32 %v2485, %v2527
    %v2529 = vpop.f32.mrf.mxu0
    %v2530 = vadd.f32 %v2487, %v2529
    %v2531 = vpop.f32.mrf.mxu0
    %v2532 = vadd.f32 %v2489, %v2531
    %2533 = vdwg.mxu0
    %v2534 = vmax.f32 %v2526, 0.0
    %v2535 = vmax.f32 %v2528, 0.0
    %v2536 = vmax.f32 %v2530, 0.0
    %v2537 = vmax.f32 %v2532, 0.0
    %v2538 = vpack.c.bf16 %v2536, %v2534
    %v2539 = vpack.c.bf16 %v2537, %v2535
    %v2540 = vld [vmem:[#allocation8] sm:$0xf]
    %v2541 = vld [vmem:[#allocation8 + $0x4] sm:$0xf]
    %v2542 = vld [vmem:[#allocation8 + $0x8] sm:$0xf]
    %v2543 = vld [vmem:[#allocation8 + $0xc] sm:$0xf]
    %v2544 = vld [vmem:[#allocation8 + $0x10] sm:$0xf]
    %v2545 = vld [vmem:[#allocation8 + $0x14] sm:$0xf]
    %v2546 = vld [vmem:[#allocation8 + $0x18] sm:$0xf]
    %v2547 = vld [vmem:[#allocation8 + $0x1c] sm:$0xf]
    %v2548 = vld [vmem:[#allocation8 + $0x20] sm:$0xf]
    %v2549 = vld [vmem:[#allocation8 + $0x24] sm:$0xf]
    %v2550 = vld [vmem:[#allocation8 + $0x28] sm:$0xf]
    %v2551 = vld [vmem:[#allocation8 + $0x2c] sm:$0xf]
    %v2552 = vld [vmem:[#allocation8 + $0x30] sm:$0xf]
    %v2553 = vld [vmem:[#allocation8 + $0x34] sm:$0xf]
    %v2554 = vld [vmem:[#allocation8 + $0x38] sm:$0xf]
    %v2555 = vld [vmem:[#allocation8 + $0x3c] sm:$0xf]
    %v2556 = vld [vmem:[#allocation8 + $0x40] sm:$0xf]
    %v2557 = vld [vmem:[#allocation8 + $0x44] sm:$0xf]
    %v2558 = vld [vmem:[#allocation8 + $0x48] sm:$0xf]
    %v2559 = vld [vmem:[#allocation8 + $0x4c] sm:$0xf]
    %v2560 = vld [vmem:[#allocation8 + $0x50] sm:$0xf]
    %v2561 = vld [vmem:[#allocation8 + $0x54] sm:$0xf]
    %v2562 = vld [vmem:[#allocation8 + $0x58] sm:$0xf]
    %v2563 = vld [vmem:[#allocation8 + $0x5c] sm:$0xf]
    %v2564 = vld [vmem:[#allocation8 + $0x60] sm:$0xf]
    %v2565 = vld [vmem:[#allocation8 + $0x64] sm:$0xf]
    %v2566 = vld [vmem:[#allocation8 + $0x68] sm:$0xf]
    %v2567 = vld [vmem:[#allocation8 + $0x6c] sm:$0xf]
    %v2568 = vld [vmem:[#allocation8 + $0x70] sm:$0xf]
    %v2569 = vld [vmem:[#allocation8 + $0x74] sm:$0xf]
    %v2570 = vld [vmem:[#allocation8 + $0x78] sm:$0xf]
    %v2571 = vld [vmem:[#allocation8 + $0x7c] sm:$0xf]
    %v2573 = vlaneseq
    %v2574 = vshrl.u32 %v2573, 7
    %v2575 = vsub.s32 0, %v2574
    %v2576 = vrot.slane %v90, %v2575
    %v2610 = vunpack.c.l.b16 %v2540
    %v2611 = vunpack.c.l.b16 %v2541
    %v2612 = vunpack.c.l.b16 %v2542
    %v2613 = vunpack.c.l.b16 %v2543
    %v2614 = vunpack.c.l.b16 %v2544
    %v2615 = vunpack.c.l.b16 %v2545
    %v2616 = vunpack.c.l.b16 %v2546
    %v2617 = vunpack.c.l.b16 %v2547
    %v2618 = vunpack.c.l.b16 %v2548
    %v2619 = vunpack.c.l.b16 %v2549
    %v2620 = vunpack.c.l.b16 %v2550
    %v2621 = vunpack.c.l.b16 %v2551
    %v2622 = vunpack.c.l.b16 %v2552
    %v2623 = vunpack.c.l.b16 %v2553
    %v2624 = vunpack.c.l.b16 %v2554
    %v2625 = vunpack.c.l.b16 %v2555
    %v2626 = vunpack.c.l.b16 %v2556
    %v2627 = vunpack.c.l.b16 %v2557
    %v2628 = vunpack.c.l.b16 %v2558
    %v2629 = vunpack.c.l.b16 %v2559
    %v2630 = vunpack.c.l.b16 %v2560
    %v2631 = vunpack.c.l.b16 %v2561
    %v2632 = vunpack.c.l.b16 %v2562
    %v2633 = vunpack.c.l.b16 %v2563
    %v2634 = vunpack.c.l.b16 %v2564
    %v2635 = vunpack.c.l.b16 %v2565
    %v2636 = vunpack.c.l.b16 %v2566
    %v2637 = vunpack.c.l.b16 %v2567
    %v2638 = vunpack.c.l.b16 %v2568
    %v2639 = vunpack.c.l.b16 %v2569
    %v2640 = vunpack.c.l.b16 %v2570
    %v2641 = vunpack.c.l.b16 %v2571
    %v2642 = vpack.c.b16 %v2611, %v2610
    %v2643 = vpack.c.b16 %v2613, %v2612
    %v2644 = vpack.c.b16 %v2615, %v2614
    %v2645 = vpack.c.b16 %v2617, %v2616
    %v2646 = vpack.c.b16 %v2619, %v2618
    %v2647 = vpack.c.b16 %v2621, %v2620
    %v2648 = vpack.c.b16 %v2623, %v2622
    %v2649 = vpack.c.b16 %v2625, %v2624
    %v2650 = vpack.c.b16 %v2627, %v2626
    %v2651 = vpack.c.b16 %v2629, %v2628
    %v2652 = vpack.c.b16 %v2631, %v2630
    %v2653 = vpack.c.b16 %v2633, %v2632
    %v2654 = vpack.c.b16 %v2635, %v2634
    %v2655 = vpack.c.b16 %v2637, %v2636
    %v2656 = vpack.c.b16 %v2639, %v2638
    %v2657 = vpack.c.b16 %v2641, %v2640
    %2674 = vmatprep.subr.bf16.mxu0 0
    %2675 = vmatpush1.bf16.msra.mxu0 %v2649
    %2676 = vmatprep.subr.bf16.mxu0 0
    %2677 = vmatpush1.bf16.msra.mxu0 %v2648
    %2678 = vmatprep.subr.bf16.mxu0 0
    %2679 = vmatpush1.bf16.msra.mxu0 %v2647
    %2680 = vmatprep.subr.bf16.mxu0 0
    %2681 = vmatpush1.bf16.msra.mxu0 %v2646
    %2682 = vmatprep.subr.bf16.mxu0 0
    %2683 = vmatpush1.bf16.msra.mxu0 %v2645
    %2684 = vmatprep.subr.bf16.mxu0 0
    %2685 = vmatpush1.bf16.msra.mxu0 %v2644
    %2686 = vmatprep.subr.bf16.mxu0 0
    %2687 = vmatpush1.bf16.msra.mxu0 %v2643
    %2688 = vmatprep.subr.bf16.mxu0 0
    %2689 = vmatpush1.bf16.msra.mxu0 %v2642
    %2690 = vmatprep.subr.bf16.mxu0 0
    %2691 = vmatpush2.bf16.msra.mxu0 %v2657
    %2692 = vmatprep.subr.bf16.mxu0 0
    %2693 = vmatpush2.bf16.msra.mxu0 %v2656
    %2694 = vmatprep.subr.bf16.mxu0 0
    %2695 = vmatpush2.bf16.msra.mxu0 %v2655
    %2696 = vmatprep.subr.bf16.mxu0 0
    %2697 = vmatpush2.bf16.msra.mxu0 %v2654
    %2698 = vmatprep.subr.bf16.mxu0 0
    %2699 = vmatpush2.bf16.msra.mxu0 %v2653
    %2700 = vmatprep.subr.bf16.mxu0 0
    %2701 = vmatpush2.bf16.msra.mxu0 %v2652
    %2702 = vmatprep.subr.bf16.mxu0 0
    %2703 = vmatpush2.bf16.msra.mxu0 %v2651
    %2704 = vmatprep.subr.bf16.mxu0 0
    %2705 = vmatpush2.bf16.msra.mxu0 %v2650
    %2706 = vmatprep.mubr.bf16.mxu0 %v2539
    %2707 = vmatmul.mubr.bf16.gmra.mxu0 %v2538
    %v2708 = vpop.f32.mrf.mxu0
    %v2709 = vadd.f32 %v2576, %v2708
    %v2710 = vpop.f32.mrf.mxu0
    %v2711 = vpop.f32.mrf.mxu0
    %v2712 = vadd.f32 %v2576, %v2711
    %v2713 = vpop.f32.mrf.mxu0
    %2714 = vdwg.mxu0
    %v2715 = vmax.f32 %v2709, 0.0
    %v2716 = vmax.f32 %v2712, 0.0
    %v2717 = vpack.c.bf16 %v2716, %v2715
    %v2718 = vld [vmem:[#allocation8 + $0x80] sm:$0xf]
    %v2719 = vld [vmem:[#allocation8 + $0x84] sm:$0xf]
    %v2720 = vld [vmem:[#allocation8 + $0x88] sm:$0xf]
    %v2721 = vld [vmem:[#allocation8 + $0x8c] sm:$0xf]
    %v2722 = vld [vmem:[#allocation8 + $0x90] sm:$0xf]
    %v2723 = vld [vmem:[#allocation8 + $0x94] sm:$0xf]
    %v2724 = vld [vmem:[#allocation8 + $0x98] sm:$0xf]
    %v2725 = vld [vmem:[#allocation8 + $0x9c] sm:$0xf]
    %v2726 = vld [vmem:[#allocation8 + $0xa0] sm:$0xf]
    %v2727 = vld [vmem:[#allocation8 + $0xa4] sm:$0xf]
    %v2728 = vld [vmem:[#allocation8 + $0xa8] sm:$0xf]
    %v2729 = vld [vmem:[#allocation8 + $0xac] sm:$0xf]
    %v2730 = vld [vmem:[#allocation8 + $0xb0] sm:$0xf]
    %v2731 = vld [vmem:[#allocation8 + $0xb4] sm:$0xf]
    %v2732 = vld [vmem:[#allocation8 + $0xb8] sm:$0xf]
    %v2733 = vld [vmem:[#allocation8 + $0xbc] sm:$0xf]
    %v2735 = vlaneseq
    %v2736 = vshrl.u32 %v2735, 7
    %v2737 = vsub.s32 0, %v2736
    %v2738 = vrot.slane %v91, %v2737
    %v2756 = vunpack.c.l.b16 %v2718
    %v2757 = vunpack.c.l.b16 %v2719
    %v2758 = vunpack.c.l.b16 %v2720
    %v2759 = vunpack.c.l.b16 %v2721
    %v2760 = vunpack.c.l.b16 %v2722
    %v2761 = vunpack.c.l.b16 %v2723
    %v2762 = vunpack.c.l.b16 %v2724
    %v2763 = vunpack.c.l.b16 %v2725
    %v2764 = vunpack.c.l.b16 %v2726
    %v2765 = vunpack.c.l.b16 %v2727
    %v2766 = vunpack.c.l.b16 %v2728
    %v2767 = vunpack.c.l.b16 %v2729
    %v2768 = vunpack.c.l.b16 %v2730
    %v2769 = vunpack.c.l.b16 %v2731
    %v2770 = vunpack.c.l.b16 %v2732
    %v2771 = vunpack.c.l.b16 %v2733
    %v2772 = vpack.c.b16 %v2757, %v2756
    %v2773 = vpack.c.b16 %v2759, %v2758
    %v2774 = vpack.c.b16 %v2761, %v2760
    %v2775 = vpack.c.b16 %v2763, %v2762
    %v2776 = vpack.c.b16 %v2765, %v2764
    %v2777 = vpack.c.b16 %v2767, %v2766
    %v2778 = vpack.c.b16 %v2769, %v2768
    %v2779 = vpack.c.b16 %v2771, %v2770
    %2788 = vmatprep.subr.bf16.mxu0 0
    %2789 = vmatpush1.bf16.msra.mxu0 %v2779
    %2790 = vmatprep.subr.bf16.mxu0 0
    %2791 = vmatpush1.bf16.msra.mxu0 %v2778
    %2792 = vmatprep.subr.bf16.mxu0 0
    %2793 = vmatpush1.bf16.msra.mxu0 %v2777
    %2794 = vmatprep.subr.bf16.mxu0 0
    %2795 = vmatpush1.bf16.msra.mxu0 %v2776
    %2796 = vmatprep.subr.bf16.mxu0 0
    %2797 = vmatpush1.bf16.msra.mxu0 %v2775
    %2798 = vmatprep.subr.bf16.mxu0 0
    %2799 = vmatpush1.bf16.msra.mxu0 %v2774
    %2800 = vmatprep.subr.bf16.mxu0 0
    %2801 = vmatpush1.bf16.msra.mxu0 %v2773
    %2802 = vmatprep.subr.bf16.mxu0 0
    %2803 = vmatpush1.bf16.msra.mxu0 %v2772
    %2804 = vmatprep.subr.bf16.mxu0 0
    %2805 = vmatpush2.bf16.msra.mxu0 0
    %2806 = vmatprep.subr.bf16.mxu0 0
    %2807 = vmatpush2.bf16.msra.mxu0 0
    %2808 = vmatprep.subr.bf16.mxu0 0
    %2809 = vmatpush2.bf16.msra.mxu0 0
    %2810 = vmatprep.subr.bf16.mxu0 0
    %2811 = vmatpush2.bf16.msra.mxu0 0
    %2812 = vmatprep.subr.bf16.mxu0 0
    %2813 = vmatpush2.bf16.msra.mxu0 0
    %2814 = vmatprep.subr.bf16.mxu0 0
    %2815 = vmatpush2.bf16.msra.mxu0 0
    %2816 = vmatprep.subr.bf16.mxu0 0
    %2817 = vmatpush2.bf16.msra.mxu0 0
    %2818 = vmatprep.subr.bf16.mxu0 0
    %2819 = vmatpush2.bf16.msra.mxu0 0
    %2820 = vmatprep.mubr.bf16.mxu0 0
    %2821 = vmatmul.mubr.bf16.gmra.mxu0 %v2717
    %v2822 = vpop.f32.mrf.mxu0
    %v2823 = vadd.f32 %v2738, %v2822
    %v2824 = vpop.f32.mrf.mxu0
    %v2825 = vpop.f32.mrf.mxu0
    %v2826 = vadd.f32 %v2738, %v2825
    %v2827 = vpop.f32.mrf.mxu0
    %2828 = vdwg.mxu0
    %v2829 = vpack.c.bf16 %v2826, %v2823
    %v2831 = vunpack.c.l.b16 %v2829
    %v2832 = vunpack.c.h.b16 %v2829
    %v2833 = vpack.c.b16 %v2831, %v2831
    %v2834 = vpack.c.b16 %v2832, %v2832
    %2837 = vst [vmem:[#allocation11] sm:$0xf] %v2833
    %2838 = vst [vmem:[#allocation11 + $0x4] sm:$0xf] %v2834
    // Predicated region
    $region42: #{tpu_custom_call.1} parent=1 // pred_check
      _
    $region43: #{tpu_custom_call.1} parent=1 // pred_check_branch
      %2840 = sbr.rel (0) target = $region45
    $region44: #{tpu_custom_call.1} parent=1 // pred_region
      %s2842 = ssub.s32 128, 128
      %2843 = vsyncadd [#allocation4], %s2842
      %s2844 = sshll.u32 [#allocation11], 4
      %s2845 = int_to_ptr.vmem [resolvable:$true] %s2844
      %2850 = dma.vmem_to_hbm [thread:$0]  %s2845, 128, %s5, [#allocation4], 64, 64, 4
    $region45: #{tpu_custom_call.1} parent=1 // pred_fallthru
      _
    // Predicated region
    $region46: #{tpu_custom_call.1} parent=1 // pred_check
      _
    $region47: #{tpu_custom_call.1} parent=1 // pred_check_branch
      %2852 = sbr.rel (0) target = $region49
    $region48: #{tpu_custom_call.1} parent=1 // pred_region
      %2853 = dma.done [#allocation4], 128
    $region49: #{tpu_custom_call.1} parent=1 // pred_fallthru
      _
    %2854 = vsyncpa [#allocation3], 1
    %2855 = vsyncpa [#allocation6], 1
    %2856 = vsyncpa [#allocation9], 1
    %2857 = vsyncpa [#allocation4], 1

</llo_original>
